<compile_context>
chip_gen: v5e
topology: v5e:2x2
jax: 0.10.0
libtpu: 0.0.40
codegen_flags: <defaults>
</compile_context>

<pallas_src>
import jax
import jax.numpy as jnp
from jax import lax
from jax.experimental import pallas as pl
from jax.experimental.pallas import tpu as pltpu


def _round_up(x, m):
    return (x + m - 1) // m * m


def _pick_time_block(T):
    for tb in (32, 16, 8, 4, 2, 1):
        if T % tb == 0:
            return tb
    return 1


def _lstm_recurrence_kernel(gx_ref, whh_ref, ctx_ref, hout_ref, cout_ref,
                            h_sc, c_sc):
    """One grid step == Tb LSTM timesteps (inner unrolled loop).

    gx_ref : (Tb, Bp, 4Hp) precomputed x@W_ih^T + bias for this time block (f32)
    whh_ref: (Hp, 4Hp)     recurrent weight (f32 or bf16), constant index => resident
    ctx_ref: (Tb, Bp, Hp)  hidden states for this block (time-major, lane-dense)
    hout_ref/cout_ref: (Bp, Hp) final h_T / c_T (constant index; only written on
        the last grid step — earlier the VMEM buffer holds don't-care data, which
        is fine because the final write wins before the single HBM writeback).
    h_sc/c_sc: (Bp, Hp) f32 carry across time blocks.
    """
    tb = gx_ref.shape[0]
    hp = hout_ref.shape[-1]
    blk = pl.program_id(0)

    @pl.when(blk == 0)
    def _():
        # init_state: h0 = c0 = zeros
        h_sc[...] = jnp.zeros_like(h_sc)
        c_sc[...] = jnp.zeros_like(c_sc)

    def step(s, carry):
        h, c = carry
        # gates = precomputed_x_proj[t] + h_{t-1} @ W_hh^T   -> (Bp, 4Hp), f32 acc
        gates = gx_ref[s] + jnp.dot(
            h.astype(whh_ref.dtype), whh_ref[...],
            preferred_element_type=jnp.float32)
        # PyTorch gate order: i, f, g, o — slices are lane-aligned (hp % 128 == 0)
        i_g = jax.nn.sigmoid(gates[:, 0 * hp:1 * hp])
        f_g = jax.nn.sigmoid(gates[:, 1 * hp:2 * hp])
        g_g = jnp.tanh(gates[:, 2 * hp:3 * hp])
        o_g = jax.nn.sigmoid(gates[:, 3 * hp:4 * hp])
        c_new = f_g * c + i_g * g_g
        h_new = o_g * jnp.tanh(c_new)
        # full-tile, unmasked store of this step's hidden state (time-major)
        ctx_ref[s] = h_new.astype(ctx_ref.dtype)
        return h_new, c_new

    h_fin, c_fin = lax.fori_loop(0, tb, step, (h_sc[...], c_sc[...]),
                                 unroll=True)
    h_sc[...] = h_fin
    c_sc[...] = c_fin

    @pl.when(blk == pl.num_programs(0) - 1)
    def _():
        hout_ref[...] = h_fin
        cout_ref[...] = c_fin


def encoder_lstm_forward(inputs, params, *, compute_dtype=jnp.float32,
                         time_block=None):
    """inputs: (B, T) int32 token ids.  Returns (ctx, decoder_init, c_t)."""
    emb_table = params["embedding"]          # (V, E)
    w_ih = params["w_ih"]                    # (4H, E)   PyTorch weight_ih_l0
    w_hh = params["w_hh"]                    # (4H, H)   PyTorch weight_hh_l0
    bias = params["b_ih"] + params["b_hh"]   # (4H,)
    w_dec = params["w_dec"]                  # (H, H)    encoder2decoder.weight
    b_dec = params["b_dec"]                  # (H,)

    B, T = inputs.shape
    E = emb_table.shape[1]
    H = w_hh.shape[1]

    Bp = _round_up(B, 8)                     # sublane-aligned batch
    Hp = _round_up(H, 128)                   # lane-aligned hidden
    G = 4 * Hp                               # padded gate width (multiple of 256)

    tb = _pick_time_block(T) if time_block is None else time_block
    assert T % tb == 0, f"time_block {tb} must divide T={T}"

    # --- glue: embedding gather (+ identity dropout), directly time-major ------
    # (only the tiny (B,T) id array is transposed — no HBM pass over activations)
    x_tm = jnp.take(emb_table, inputs.T, axis=0)             # (T, B, E)
    x_tm = jnp.pad(x_tm, ((0, 0), (0, Bp - B), (0, 0)))      # (T, Bp, E)

    # --- pad weights to lane-aligned per-gate blocks ---------------------------
    # Padded gate columns are zero => padded h/c lanes stay exactly 0 forever.
    def _pad_gate_cols(w):                   # (K, 4H) -> (K, 4Hp)
        K = w.shape[0]
        return jnp.pad(w.reshape(K, 4, H),
                       ((0, 0), (0, 0), (0, Hp - H))).reshape(K, G)

    wih_p = _pad_gate_cols(jnp.transpose(w_ih))              # (E, G)
    whh_p = jnp.pad(_pad_gate_cols(jnp.transpose(w_hh)),
                    ((0, Hp - H), (0, 0)))                   # (Hp, G)
    b_p = jnp.pad(bias.reshape(4, H),
                  ((0, 0), (0, Hp - H))).reshape(1, G)       # (1, G)

    # --- hoisted input projection: one big matmul for ALL timesteps ------------
    gx = (jnp.dot(x_tm.reshape(T * Bp, E).astype(compute_dtype),
                  wih_p.astype(compute_dtype),
                  preferred_element_type=jnp.float32)
          + b_p).reshape(T, Bp, G)                           # (T, Bp, G) f32

    whh_k = whh_p.astype(compute_dtype)

    grid_spec = pltpu.PrefetchScalarGridSpec(
        num_scalar_prefetch=0,
        grid=(T // tb,),
        in_specs=[
            pl.BlockSpec((tb, Bp, G), lambda t: (t, 0, 0)),   # precomputed gates
            pl.BlockSpec((Hp, G), lambda t: (0, 0)),          # W_hh^T (resident)
        ],
        out_specs=[
            pl.BlockSpec((tb, Bp, Hp), lambda t: (t, 0, 0)),  # ctx, time-major
            pl.BlockSpec((Bp, Hp), lambda t: (0, 0)),         # h_T
            pl.BlockSpec((Bp, Hp), lambda t: (0, 0)),         # c_T
        ],
        scratch_shapes=[
            pltpu.VMEM((Bp, Hp), jnp.float32),   # h carry (f32 always)
            pltpu.VMEM((Bp, Hp), jnp.float32),   # c carry (f32 always)
        ],
    )

    ctx_tm, h_t, c_t = pl.pallas_call(
        _lstm_recurrence_kernel,
        grid_spec=grid_spec,
        out_shape=(
            jax.ShapeDtypeStruct((T, Bp, Hp), jnp.float32),
            jax.ShapeDtypeStruct((Bp, Hp), jnp.float32),
            jax.ShapeDtypeStruct((Bp, Hp), jnp.float32),
        ),
        compiler_params=pltpu.CompilerParams(
            dimension_semantics=("arbitrary",),   # time recurrence is sequential
        ),
    )(gx, whh_k)

    # un-pad + back to batch_first (single fused XLA transpose+slice)
    ctx = jnp.transpose(ctx_tm, (1, 0, 2))[:B, :, :H]        # (B, T, H)
    h_t = h_t[:B, :H]
    c_t = c_t[:B, :H]

    # encoder2decoder runs once -> plain JAX keeps W_dec out of per-step VMEM
    decoder_init = jnp.tanh(jnp.dot(h_t, jnp.transpose(w_dec)) + b_dec)
    return ctx, decoder_init, c_t


# ------------------------- pure-JAX reference (for checking) ------------------
def encoder_lstm_reference(inputs, params):
    emb = jnp.take(params["embedding"], inputs, axis=0)      # (B, T, E)
    B, T, E = emb.shape
    H = params["w_hh"].shape[1]
    w_ih, w_hh = params["w_ih"], params["w_hh"]
    b = params["b_ih"] + params["b_hh"]

    def step(carry, x_t):
        h, c = carry
        gates = x_t @ w_ih.T + h @ w_hh.T + b
        i = jax.nn.sigmoid(gates[:, 0 * H:1 * H])
        f = jax.nn.sigmoid(gates[:, 1 * H:2 * H])
        g = jnp.tanh(gates[:, 2 * H:3 * H])
        o = jax.nn.sigmoid(gates[:, 3 * H:4 * H])
        c = f * c + i * g
        h = o * jnp.tanh(c)
        return (h, c), h

    h0 = jnp.zeros((B, H), jnp.float32)
    c0 = jnp.zeros((B, H), jnp.float32)
    (h_t, c_t), hs = lax.scan(step, (h0, c0), jnp.transpose(emb, (1, 0, 2)))
    ctx = jnp.transpose(hs, (1, 0, 2))
    dec_init = jnp.tanh(h_t @ params["w_dec"].T + params["b_dec"])
    return ctx, dec_init, c_t


if __name__ == "__main__":
    VOCAB, EMB, HID = 32, 32, 32
    B, T = 2, 8
    PAD_IDX = 0

    key = jax.random.PRNGKey(0)
    ks = jax.random.split(key, 8)
    scale = 1.0 / jnp.sqrt(HID)

    params = {
        "embedding": jax.random.normal(ks[0], (VOCAB, EMB), jnp.float32) * 0.1,
        "w_ih": jax.random.uniform(ks[1], (4 * HID, EMB), jnp.float32, -scale, scale),
        "w_hh": jax.random.uniform(ks[2], (4 * HID, HID), jnp.float32, -scale, scale),
        "b_ih": jax.random.uniform(ks[3], (4 * HID,), jnp.float32, -scale, scale),
        "b_hh": jax.random.uniform(ks[4], (4 * HID,), jnp.float32, -scale, scale),
        "w_dec": jax.random.uniform(ks[5], (HID, HID), jnp.float32, -scale, scale),
        "b_dec": jax.random.uniform(ks[6], (HID,), jnp.float32, -scale, scale),
    }
    # padding_idx: zero that embedding row (nn.Embedding semantics)
    params["embedding"] = params["embedding"].at[PAD_IDX].set(0.0)

    inputs = jax.random.randint(ks[7], (B, T), 0, VOCAB, dtype=jnp.int32)

    ctx_r, dec_r, c_r = encoder_lstm_reference(inputs, params)

    # 1) f32, auto time block (single block)
    ctx, dec_init, c_t = encoder_lstm_forward(inputs, params)
    jax.block_until_ready((ctx, dec_init, c_t))
    assert ctx.shape == (B, T, HID) and dec_init.shape == (B, HID) and c_t.shape == (B, HID)
    assert jnp.allclose(ctx, ctx_r, atol=2e-5, rtol=1e-5)
    assert jnp.allclose(dec_init, dec_r, atol=2e-5, rtol=1e-5)
    assert jnp.allclose(c_t, c_r, atol=2e-5, rtol=1e-5)

    # 2) f32, small time block -> exercises the cross-block h/c carry path
    ctx2, dec2, c2 = encoder_lstm_forward(inputs, params, time_block=2)
    jax.block_until_ready((ctx2, dec2, c2))
    assert jnp.allclose(ctx2, ctx_r, atol=2e-5, rtol=1e-5)
    assert jnp.allclose(dec2, dec_r, atol=2e-5, rtol=1e-5)
    assert jnp.allclose(c2, c_r, atol=2e-5, rtol=1e-5)

    # 3) bf16 matmul operands (f32 state/accumulation) -> loose tolerance
    ctx3, dec3, c3 = encoder_lstm_forward(inputs, params,
                                          compute_dtype=jnp.bfloat16)
    jax.block_until_ready((ctx3, dec3, c3))
    assert jnp.allclose(ctx3, ctx_r, atol=5e-2)
    assert jnp.allclose(dec3, dec_r, atol=5e-2)
    assert jnp.allclose(c3, c_r, atol=5e-2)

    print("KERNEL_OK")
</pallas_src>

<mosaic_0001>
module attributes {stable_mosaic.version = 11 : i64} {
  func.func @_lstm_recurrence_kernel(%arg0: i32, %arg1: memref<8x8x512xf32, #tpu.memory_space<vmem>>, %arg2: memref<128x512xf32, #tpu.memory_space<vmem>>, %arg3: memref<8x8x128xf32, #tpu.memory_space<vmem>>, %arg4: memref<8x128xf32, #tpu.memory_space<vmem>>, %arg5: memref<8x128xf32, #tpu.memory_space<vmem>>, %arg6: memref<8x128xf32, #tpu.memory_space<vmem>>, %arg7: memref<8x128xf32, #tpu.memory_space<vmem>>) attributes {dimension_semantics = [#tpu.dimension_semantics<arbitrary>], iteration_bounds = array<i64: 1>, scalar_prefetch = 0 : i64, scratch_operands = 2 : i64, tpu.core_type = #tpu.core_type<tc>, window_params = [{transform_indices = @transform_0, window_bounds = array<i64: 8, 8, 512>}, {pipeline_mode = #tpu.pipeline_mode<synchronous>, transform_indices = @transform_1, window_bounds = array<i64: 128, 512>}, {transform_indices = @transform_2, window_bounds = array<i64: 8, 8, 128>}, {pipeline_mode = #tpu.pipeline_mode<synchronous>, transform_indices = @transform_3, window_bounds = array<i64: 8, 128>}, {pipeline_mode = #tpu.pipeline_mode<synchronous>, transform_indices = @transform_4, window_bounds = array<i64: 8, 128>}]} {
    %c0_i32 = arith.constant 0 : i32
    %0 = arith.cmpi eq, %arg0, %c0_i32 : i32
    %1 = arith.extui %0 : i1 to i32
    %c0_i32_0 = arith.constant 0 : i32
    %2 = arith.cmpi ne, %1, %c0_i32_0 : i32
    scf.if %2 {
      %cst_90 = arith.constant 0.000000e+00 : f32
      %290 = vector.broadcast %cst_90 : f32 to vector<8x128xf32>
      %c0_91 = arith.constant 0 : index
      %c0_92 = arith.constant 0 : index
      %291 = vector.load %arg6[%c0_91, %c0_92] : memref<8x128xf32, #tpu.memory_space<vmem>>, vector<8x128xf32>
      tpu.vector_store %arg6[%c0_91, %c0_92], %290 {strides = array<i32>} : memref<8x128xf32, #tpu.memory_space<vmem>>, vector<8x128xf32>,
      %cst_93 = arith.constant 0.000000e+00 : f32
      %292 = vector.broadcast %cst_93 : f32 to vector<8x128xf32>
      %c0_94 = arith.constant 0 : index
      %c0_95 = arith.constant 0 : index
      %293 = vector.load %arg7[%c0_94, %c0_95] : memref<8x128xf32, #tpu.memory_space<vmem>>, vector<8x128xf32>
      tpu.vector_store %arg7[%c0_94, %c0_95], %292 {strides = array<i32>} : memref<8x128xf32, #tpu.memory_space<vmem>>, vector<8x128xf32>,
    } else {
    }
    %c0 = arith.constant 0 : index
    %c0_1 = arith.constant 0 : index
    %3 = vector.load %arg6[%c0, %c0_1] : memref<8x128xf32, #tpu.memory_space<vmem>>, vector<8x128xf32>
    %c0_2 = arith.constant 0 : index
    %c0_3 = arith.constant 0 : index
    %4 = vector.load %arg7[%c0_2, %c0_3] : memref<8x128xf32, #tpu.memory_space<vmem>>, vector<8x128xf32>
    %c0_i32_4 = arith.constant 0 : i32
    %5 = arith.index_cast %c0_i32_4 : i32 to index
    %c0_5 = arith.constant 0 : index
    %c0_6 = arith.constant 0 : index
    %6 = vector.load %arg1[%5, %c0_5, %c0_6] : memref<8x8x512xf32, #tpu.memory_space<vmem>>, vector<1x8x512xf32>
    %7 = vector.shape_cast %6 : vector<1x8x512xf32> to vector<8x512xf32>
    %c0_7 = arith.constant 0 : index
    %c0_8 = arith.constant 0 : index
    %8 = vector.load %arg2[%c0_7, %c0_8] : memref<128x512xf32, #tpu.memory_space<vmem>>, vector<128x512xf32>
    %cst = arith.constant dense<0.000000e+00> : vector<8x512xf32>
    %9 = tpu.matmul %3, %8, %cst {dimension_numbers = #tpu.dot_dimension_numbers<[1], [0], [0], [1], [0, 0, 1, 1], [], []>} : vector<8x128xf32>, vector<128x512xf32>, vector<8x512xf32> -> vector<8x512xf32>
    %10 = arith.addf %7, %9 : vector<8x512xf32>
    %11 = vector.extract_strided_slice %10 {offsets = [0, 0], sizes = [8, 128], strides = [1, 1]} : vector<8x512xf32> to vector<8x128xf32>
    %12 = arith.negf %11 : vector<8x128xf32>
    %13 = math.exp %12 : vector<8x128xf32>
    %cst_9 = arith.constant 1.000000e+00 : f32
    %14 = vector.broadcast %cst_9 : f32 to vector<8x128xf32>
    %15 = arith.addf %14, %13 : vector<8x128xf32>
    %16 = arith.divf %14, %15 : vector<8x128xf32>
    %17 = vector.extract_strided_slice %10 {offsets = [0, 128], sizes = [8, 128], strides = [1, 1]} : vector<8x512xf32> to vector<8x128xf32>
    %18 = arith.negf %17 : vector<8x128xf32>
    %19 = math.exp %18 : vector<8x128xf32>
    %cst_10 = arith.constant 1.000000e+00 : f32
    %20 = vector.broadcast %cst_10 : f32 to vector<8x128xf32>
    %21 = arith.addf %20, %19 : vector<8x128xf32>
    %22 = arith.divf %20, %21 : vector<8x128xf32>
    %23 = vector.extract_strided_slice %10 {offsets = [0, 256], sizes = [8, 128], strides = [1, 1]} : vector<8x512xf32> to vector<8x128xf32>
    %24 = math.tanh %23 : vector<8x128xf32>
    %25 = vector.extract_strided_slice %10 {offsets = [0, 384], sizes = [8, 128], strides = [1, 1]} : vector<8x512xf32> to vector<8x128xf32>
    %26 = arith.negf %25 : vector<8x128xf32>
    %27 = math.exp %26 : vector<8x128xf32>
    %cst_11 = arith.constant 1.000000e+00 : f32
    %28 = vector.broadcast %cst_11 : f32 to vector<8x128xf32>
    %29 = arith.addf %28, %27 : vector<8x128xf32>
    %30 = arith.divf %28, %29 : vector<8x128xf32>
    %31 = arith.mulf %22, %4 : vector<8x128xf32>
    %32 = arith.mulf %16, %24 : vector<8x128xf32>
    %33 = arith.addf %31, %32 : vector<8x128xf32>
    %34 = math.tanh %33 : vector<8x128xf32>
    %35 = arith.mulf %30, %34 : vector<8x128xf32>
    %36 = arith.index_cast %c0_i32_4 : i32 to index
    %c0_12 = arith.constant 0 : index
    %c0_13 = arith.constant 0 : index
    %37 = vector.load %arg3[%36, %c0_12, %c0_13] : memref<8x8x128xf32, #tpu.memory_space<vmem>>, vector<1x8x128xf32>
    %38 = vector.shape_cast %37 : vector<1x8x128xf32> to vector<8x128xf32>
    %39 = vector.shape_cast %35 : vector<8x128xf32> to vector<1x8x128xf32>
    tpu.vector_store %arg3[%36, %c0_12, %c0_13], %39 {strides = array<i32>} : memref<8x8x128xf32, #tpu.memory_space<vmem>>, vector<1x8x128xf32>,
    %c1_i32 = arith.constant 1 : i32
    %40 = arith.index_cast %c1_i32 : i32 to index
    %c0_14 = arith.constant 0 : index
    %c0_15 = arith.constant 0 : index
    %41 = vector.load %arg1[%40, %c0_14, %c0_15] : memref<8x8x512xf32, #tpu.memory_space<vmem>>, vector<1x8x512xf32>
    %42 = vector.shape_cast %41 : vector<1x8x512xf32> to vector<8x512xf32>
    %c0_16 = arith.constant 0 : index
    %c0_17 = arith.constant 0 : index
    %43 = vector.load %arg2[%c0_16, %c0_17] : memref<128x512xf32, #tpu.memory_space<vmem>>, vector<128x512xf32>
    %cst_18 = arith.constant dense<0.000000e+00> : vector<8x512xf32>
    %44 = tpu.matmul %35, %43, %cst_18 {dimension_numbers = #tpu.dot_dimension_numbers<[1], [0], [0], [1], [0, 0, 1, 1], [], []>} : vector<8x128xf32>, vector<128x512xf32>, vector<8x512xf32> -> vector<8x512xf32>
    %45 = arith.addf %42, %44 : vector<8x512xf32>
    %46 = vector.extract_strided_slice %45 {offsets = [0, 0], sizes = [8, 128], strides = [1, 1]} : vector<8x512xf32> to vector<8x128xf32>
    %47 = arith.negf %46 : vector<8x128xf32>
    %48 = math.exp %47 : vector<8x128xf32>
    %cst_19 = arith.constant 1.000000e+00 : f32
    %49 = vector.broadcast %cst_19 : f32 to vector<8x128xf32>
    %50 = arith.addf %49, %48 : vector<8x128xf32>
    %51 = arith.divf %49, %50 : vector<8x128xf32>
    %52 = vector.extract_strided_slice %45 {offsets = [0, 128], sizes = [8, 128], strides = [1, 1]} : vector<8x512xf32> to vector<8x128xf32>
    %53 = arith.negf %52 : vector<8x128xf32>
    %54 = math.exp %53 : vector<8x128xf32>
    %cst_20 = arith.constant 1.000000e+00 : f32
    %55 = vector.broadcast %cst_20 : f32 to vector<8x128xf32>
    %56 = arith.addf %55, %54 : vector<8x128xf32>
    %57 = arith.divf %55, %56 : vector<8x128xf32>
    %58 = vector.extract_strided_slice %45 {offsets = [0, 256], sizes = [8, 128], strides = [1, 1]} : vector<8x512xf32> to vector<8x128xf32>
    %59 = math.tanh %58 : vector<8x128xf32>
    %60 = vector.extract_strided_slice %45 {offsets = [0, 384], sizes = [8, 128], strides = [1, 1]} : vector<8x512xf32> to vector<8x128xf32>
    %61 = arith.negf %60 : vector<8x128xf32>
    %62 = math.exp %61 : vector<8x128xf32>
    %cst_21 = arith.constant 1.000000e+00 : f32
    %63 = vector.broadcast %cst_21 : f32 to vector<8x128xf32>
    %64 = arith.addf %63, %62 : vector<8x128xf32>
    %65 = arith.divf %63, %64 : vector<8x128xf32>
    %66 = arith.mulf %57, %33 : vector<8x128xf32>
    %67 = arith.mulf %51, %59 : vector<8x128xf32>
    %68 = arith.addf %66, %67 : vector<8x128xf32>
    %69 = math.tanh %68 : vector<8x128xf32>
    %70 = arith.mulf %65, %69 : vector<8x128xf32>
    %71 = arith.index_cast %c1_i32 : i32 to index
    %c0_22 = arith.constant 0 : index
    %c0_23 = arith.constant 0 : index
    %72 = vector.load %arg3[%71, %c0_22, %c0_23] : memref<8x8x128xf32, #tpu.memory_space<vmem>>, vector<1x8x128xf32>
    %73 = vector.shape_cast %72 : vector<1x8x128xf32> to vector<8x128xf32>
    %74 = vector.shape_cast %70 : vector<8x128xf32> to vector<1x8x128xf32>
    tpu.vector_store %arg3[%71, %c0_22, %c0_23], %74 {strides = array<i32>} : memref<8x8x128xf32, #tpu.memory_space<vmem>>, vector<1x8x128xf32>,
    %c2_i32 = arith.constant 2 : i32
    %75 = arith.index_cast %c2_i32 : i32 to index
    %c0_24 = arith.constant 0 : index
    %c0_25 = arith.constant 0 : index
    %76 = vector.load %arg1[%75, %c0_24, %c0_25] : memref<8x8x512xf32, #tpu.memory_space<vmem>>, vector<1x8x512xf32>
    %77 = vector.shape_cast %76 : vector<1x8x512xf32> to vector<8x512xf32>
    %c0_26 = arith.constant 0 : index
    %c0_27 = arith.constant 0 : index
    %78 = vector.load %arg2[%c0_26, %c0_27] : memref<128x512xf32, #tpu.memory_space<vmem>>, vector<128x512xf32>
    %cst_28 = arith.constant dense<0.000000e+00> : vector<8x512xf32>
    %79 = tpu.matmul %70, %78, %cst_28 {dimension_numbers = #tpu.dot_dimension_numbers<[1], [0], [0], [1], [0, 0, 1, 1], [], []>} : vector<8x128xf32>, vector<128x512xf32>, vector<8x512xf32> -> vector<8x512xf32>
    %80 = arith.addf %77, %79 : vector<8x512xf32>
    %81 = vector.extract_strided_slice %80 {offsets = [0, 0], sizes = [8, 128], strides = [1, 1]} : vector<8x512xf32> to vector<8x128xf32>
    %82 = arith.negf %81 : vector<8x128xf32>
    %83 = math.exp %82 : vector<8x128xf32>
    %cst_29 = arith.constant 1.000000e+00 : f32
    %84 = vector.broadcast %cst_29 : f32 to vector<8x128xf32>
    %85 = arith.addf %84, %83 : vector<8x128xf32>
    %86 = arith.divf %84, %85 : vector<8x128xf32>
    %87 = vector.extract_strided_slice %80 {offsets = [0, 128], sizes = [8, 128], strides = [1, 1]} : vector<8x512xf32> to vector<8x128xf32>
    %88 = arith.negf %87 : vector<8x128xf32>
    %89 = math.exp %88 : vector<8x128xf32>
    %cst_30 = arith.constant 1.000000e+00 : f32
    %90 = vector.broadcast %cst_30 : f32 to vector<8x128xf32>
    %91 = arith.addf %90, %89 : vector<8x128xf32>
    %92 = arith.divf %90, %91 : vector<8x128xf32>
    %93 = vector.extract_strided_slice %80 {offsets = [0, 256], sizes = [8, 128], strides = [1, 1]} : vector<8x512xf32> to vector<8x128xf32>
    %94 = math.tanh %93 : vector<8x128xf32>
    %95 = vector.extract_strided_slice %80 {offsets = [0, 384], sizes = [8, 128], strides = [1, 1]} : vector<8x512xf32> to vector<8x128xf32>
    %96 = arith.negf %95 : vector<8x128xf32>
    %97 = math.exp %96 : vector<8x128xf32>
    %cst_31 = arith.constant 1.000000e+00 : f32
    %98 = vector.broadcast %cst_31 : f32 to vector<8x128xf32>
    %99 = arith.addf %98, %97 : vector<8x128xf32>
    %100 = arith.divf %98, %99 : vector<8x128xf32>
    %101 = arith.mulf %92, %68 : vector<8x128xf32>
    %102 = arith.mulf %86, %94 : vector<8x128xf32>
    %103 = arith.addf %101, %102 : vector<8x128xf32>
    %104 = math.tanh %103 : vector<8x128xf32>
    %105 = arith.mulf %100, %104 : vector<8x128xf32>
    %106 = arith.index_cast %c2_i32 : i32 to index
    %c0_32 = arith.constant 0 : index
    %c0_33 = arith.constant 0 : index
    %107 = vector.load %arg3[%106, %c0_32, %c0_33] : memref<8x8x128xf32, #tpu.memory_space<vmem>>, vector<1x8x128xf32>
    %108 = vector.shape_cast %107 : vector<1x8x128xf32> to vector<8x128xf32>
    %109 = vector.shape_cast %105 : vector<8x128xf32> to vector<1x8x128xf32>
    tpu.vector_store %arg3[%106, %c0_32, %c0_33], %109 {strides = array<i32>} : memref<8x8x128xf32, #tpu.memory_space<vmem>>, vector<1x8x128xf32>,
    %c3_i32 = arith.constant 3 : i32
    %110 = arith.index_cast %c3_i32 : i32 to index
    %c0_34 = arith.constant 0 : index
    %c0_35 = arith.constant 0 : index
    %111 = vector.load %arg1[%110, %c0_34, %c0_35] : memref<8x8x512xf32, #tpu.memory_space<vmem>>, vector<1x8x512xf32>
    %112 = vector.shape_cast %111 : vector<1x8x512xf32> to vector<8x512xf32>
    %c0_36 = arith.constant 0 : index
    %c0_37 = arith.constant 0 : index
    %113 = vector.load %arg2[%c0_36, %c0_37] : memref<128x512xf32, #tpu.memory_space<vmem>>, vector<128x512xf32>
    %cst_38 = arith.constant dense<0.000000e+00> : vector<8x512xf32>
    %114 = tpu.matmul %105, %113, %cst_38 {dimension_numbers = #tpu.dot_dimension_numbers<[1], [0], [0], [1], [0, 0, 1, 1], [], []>} : vector<8x128xf32>, vector<128x512xf32>, vector<8x512xf32> -> vector<8x512xf32>
    %115 = arith.addf %112, %114 : vector<8x512xf32>
    %116 = vector.extract_strided_slice %115 {offsets = [0, 0], sizes = [8, 128], strides = [1, 1]} : vector<8x512xf32> to vector<8x128xf32>
    %117 = arith.negf %116 : vector<8x128xf32>
    %118 = math.exp %117 : vector<8x128xf32>
    %cst_39 = arith.constant 1.000000e+00 : f32
    %119 = vector.broadcast %cst_39 : f32 to vector<8x128xf32>
    %120 = arith.addf %119, %118 : vector<8x128xf32>
    %121 = arith.divf %119, %120 : vector<8x128xf32>
    %122 = vector.extract_strided_slice %115 {offsets = [0, 128], sizes = [8, 128], strides = [1, 1]} : vector<8x512xf32> to vector<8x128xf32>
    %123 = arith.negf %122 : vector<8x128xf32>
    %124 = math.exp %123 : vector<8x128xf32>
    %cst_40 = arith.constant 1.000000e+00 : f32
    %125 = vector.broadcast %cst_40 : f32 to vector<8x128xf32>
    %126 = arith.addf %125, %124 : vector<8x128xf32>
    %127 = arith.divf %125, %126 : vector<8x128xf32>
    %128 = vector.extract_strided_slice %115 {offsets = [0, 256], sizes = [8, 128], strides = [1, 1]} : vector<8x512xf32> to vector<8x128xf32>
    %129 = math.tanh %128 : vector<8x128xf32>
    %130 = vector.extract_strided_slice %115 {offsets = [0, 384], sizes = [8, 128], strides = [1, 1]} : vector<8x512xf32> to vector<8x128xf32>
    %131 = arith.negf %130 : vector<8x128xf32>
    %132 = math.exp %131 : vector<8x128xf32>
    %cst_41 = arith.constant 1.000000e+00 : f32
    %133 = vector.broadcast %cst_41 : f32 to vector<8x128xf32>
    %134 = arith.addf %133, %132 : vector<8x128xf32>
    %135 = arith.divf %133, %134 : vector<8x128xf32>
    %136 = arith.mulf %127, %103 : vector<8x128xf32>
    %137 = arith.mulf %121, %129 : vector<8x128xf32>
    %138 = arith.addf %136, %137 : vector<8x128xf32>
    %139 = math.tanh %138 : vector<8x128xf32>
    %140 = arith.mulf %135, %139 : vector<8x128xf32>
    %141 = arith.index_cast %c3_i32 : i32 to index
    %c0_42 = arith.constant 0 : index
    %c0_43 = arith.constant 0 : index
    %142 = vector.load %arg3[%141, %c0_42, %c0_43] : memref<8x8x128xf32, #tpu.memory_space<vmem>>, vector<1x8x128xf32>
    %143 = vector.shape_cast %142 : vector<1x8x128xf32> to vector<8x128xf32>
    %144 = vector.shape_cast %140 : vector<8x128xf32> to vector<1x8x128xf32>
    tpu.vector_store %arg3[%141, %c0_42, %c0_43], %144 {strides = array<i32>} : memref<8x8x128xf32, #tpu.memory_space<vmem>>, vector<1x8x128xf32>,
    %c4_i32 = arith.constant 4 : i32
    %145 = arith.index_cast %c4_i32 : i32 to index
    %c0_44 = arith.constant 0 : index
    %c0_45 = arith.constant 0 : index
    %146 = vector.load %arg1[%145, %c0_44, %c0_45] : memref<8x8x512xf32, #tpu.memory_space<vmem>>, vector<1x8x512xf32>
    %147 = vector.shape_cast %146 : vector<1x8x512xf32> to vector<8x512xf32>
    %c0_46 = arith.constant 0 : index
    %c0_47 = arith.constant 0 : index
    %148 = vector.load %arg2[%c0_46, %c0_47] : memref<128x512xf32, #tpu.memory_space<vmem>>, vector<128x512xf32>
    %cst_48 = arith.constant dense<0.000000e+00> : vector<8x512xf32>
    %149 = tpu.matmul %140, %148, %cst_48 {dimension_numbers = #tpu.dot_dimension_numbers<[1], [0], [0], [1], [0, 0, 1, 1], [], []>} : vector<8x128xf32>, vector<128x512xf32>, vector<8x512xf32> -> vector<8x512xf32>
    %150 = arith.addf %147, %149 : vector<8x512xf32>
    %151 = vector.extract_strided_slice %150 {offsets = [0, 0], sizes = [8, 128], strides = [1, 1]} : vector<8x512xf32> to vector<8x128xf32>
    %152 = arith.negf %151 : vector<8x128xf32>
    %153 = math.exp %152 : vector<8x128xf32>
    %cst_49 = arith.constant 1.000000e+00 : f32
    %154 = vector.broadcast %cst_49 : f32 to vector<8x128xf32>
    %155 = arith.addf %154, %153 : vector<8x128xf32>
    %156 = arith.divf %154, %155 : vector<8x128xf32>
    %157 = vector.extract_strided_slice %150 {offsets = [0, 128], sizes = [8, 128], strides = [1, 1]} : vector<8x512xf32> to vector<8x128xf32>
    %158 = arith.negf %157 : vector<8x128xf32>
    %159 = math.exp %158 : vector<8x128xf32>
    %cst_50 = arith.constant 1.000000e+00 : f32
    %160 = vector.broadcast %cst_50 : f32 to vector<8x128xf32>
    %161 = arith.addf %160, %159 : vector<8x128xf32>
    %162 = arith.divf %160, %161 : vector<8x128xf32>
    %163 = vector.extract_strided_slice %150 {offsets = [0, 256], sizes = [8, 128], strides = [1, 1]} : vector<8x512xf32> to vector<8x128xf32>
    %164 = math.tanh %163 : vector<8x128xf32>
    %165 = vector.extract_strided_slice %150 {offsets = [0, 384], sizes = [8, 128], strides = [1, 1]} : vector<8x512xf32> to vector<8x128xf32>
    %166 = arith.negf %165 : vector<8x128xf32>
    %167 = math.exp %166 : vector<8x128xf32>
    %cst_51 = arith.constant 1.000000e+00 : f32
    %168 = vector.broadcast %cst_51 : f32 to vector<8x128xf32>
    %169 = arith.addf %168, %167 : vector<8x128xf32>
    %170 = arith.divf %168, %169 : vector<8x128xf32>
    %171 = arith.mulf %162, %138 : vector<8x128xf32>
    %172 = arith.mulf %156, %164 : vector<8x128xf32>
    %173 = arith.addf %171, %172 : vector<8x128xf32>
    %174 = math.tanh %173 : vector<8x128xf32>
    %175 = arith.mulf %170, %174 : vector<8x128xf32>
    %176 = arith.index_cast %c4_i32 : i32 to index
    %c0_52 = arith.constant 0 : index
    %c0_53 = arith.constant 0 : index
    %177 = vector.load %arg3[%176, %c0_52, %c0_53] : memref<8x8x128xf32, #tpu.memory_space<vmem>>, vector<1x8x128xf32>
    %178 = vector.shape_cast %177 : vector<1x8x128xf32> to vector<8x128xf32>
    %179 = vector.shape_cast %175 : vector<8x128xf32> to vector<1x8x128xf32>
    tpu.vector_store %arg3[%176, %c0_52, %c0_53], %179 {strides = array<i32>} : memref<8x8x128xf32, #tpu.memory_space<vmem>>, vector<1x8x128xf32>,
    %c5_i32 = arith.constant 5 : i32
    %180 = arith.index_cast %c5_i32 : i32 to index
    %c0_54 = arith.constant 0 : index
    %c0_55 = arith.constant 0 : index
    %181 = vector.load %arg1[%180, %c0_54, %c0_55] : memref<8x8x512xf32, #tpu.memory_space<vmem>>, vector<1x8x512xf32>
    %182 = vector.shape_cast %181 : vector<1x8x512xf32> to vector<8x512xf32>
    %c0_56 = arith.constant 0 : index
    %c0_57 = arith.constant 0 : index
    %183 = vector.load %arg2[%c0_56, %c0_57] : memref<128x512xf32, #tpu.memory_space<vmem>>, vector<128x512xf32>
    %cst_58 = arith.constant dense<0.000000e+00> : vector<8x512xf32>
    %184 = tpu.matmul %175, %183, %cst_58 {dimension_numbers = #tpu.dot_dimension_numbers<[1], [0], [0], [1], [0, 0, 1, 1], [], []>} : vector<8x128xf32>, vector<128x512xf32>, vector<8x512xf32> -> vector<8x512xf32>
    %185 = arith.addf %182, %184 : vector<8x512xf32>
    %186 = vector.extract_strided_slice %185 {offsets = [0, 0], sizes = [8, 128], strides = [1, 1]} : vector<8x512xf32> to vector<8x128xf32>
    %187 = arith.negf %186 : vector<8x128xf32>
    %188 = math.exp %187 : vector<8x128xf32>
    %cst_59 = arith.constant 1.000000e+00 : f32
    %189 = vector.broadcast %cst_59 : f32 to vector<8x128xf32>
    %190 = arith.addf %189, %188 : vector<8x128xf32>
    %191 = arith.divf %189, %190 : vector<8x128xf32>
    %192 = vector.extract_strided_slice %185 {offsets = [0, 128], sizes = [8, 128], strides = [1, 1]} : vector<8x512xf32> to vector<8x128xf32>
    %193 = arith.negf %192 : vector<8x128xf32>
    %194 = math.exp %193 : vector<8x128xf32>
    %cst_60 = arith.constant 1.000000e+00 : f32
    %195 = vector.broadcast %cst_60 : f32 to vector<8x128xf32>
    %196 = arith.addf %195, %194 : vector<8x128xf32>
    %197 = arith.divf %195, %196 : vector<8x128xf32>
    %198 = vector.extract_strided_slice %185 {offsets = [0, 256], sizes = [8, 128], strides = [1, 1]} : vector<8x512xf32> to vector<8x128xf32>
    %199 = math.tanh %198 : vector<8x128xf32>
    %200 = vector.extract_strided_slice %185 {offsets = [0, 384], sizes = [8, 128], strides = [1, 1]} : vector<8x512xf32> to vector<8x128xf32>
    %201 = arith.negf %200 : vector<8x128xf32>
    %202 = math.exp %201 : vector<8x128xf32>
    %cst_61 = arith.constant 1.000000e+00 : f32
    %203 = vector.broadcast %cst_61 : f32 to vector<8x128xf32>
    %204 = arith.addf %203, %202 : vector<8x128xf32>
    %205 = arith.divf %203, %204 : vector<8x128xf32>
    %206 = arith.mulf %197, %173 : vector<8x128xf32>
    %207 = arith.mulf %191, %199 : vector<8x128xf32>
    %208 = arith.addf %206, %207 : vector<8x128xf32>
    %209 = math.tanh %208 : vector<8x128xf32>
    %210 = arith.mulf %205, %209 : vector<8x128xf32>
    %211 = arith.index_cast %c5_i32 : i32 to index
    %c0_62 = arith.constant 0 : index
    %c0_63 = arith.constant 0 : index
    %212 = vector.load %arg3[%211, %c0_62, %c0_63] : memref<8x8x128xf32, #tpu.memory_space<vmem>>, vector<1x8x128xf32>
    %213 = vector.shape_cast %212 : vector<1x8x128xf32> to vector<8x128xf32>
    %214 = vector.shape_cast %210 : vector<8x128xf32> to vector<1x8x128xf32>
    tpu.vector_store %arg3[%211, %c0_62, %c0_63], %214 {strides = array<i32>} : memref<8x8x128xf32, #tpu.memory_space<vmem>>, vector<1x8x128xf32>,
    %c6_i32 = arith.constant 6 : i32
    %215 = arith.index_cast %c6_i32 : i32 to index
    %c0_64 = arith.constant 0 : index
    %c0_65 = arith.constant 0 : index
    %216 = vector.load %arg1[%215, %c0_64, %c0_65] : memref<8x8x512xf32, #tpu.memory_space<vmem>>, vector<1x8x512xf32>
    %217 = vector.shape_cast %216 : vector<1x8x512xf32> to vector<8x512xf32>
    %c0_66 = arith.constant 0 : index
    %c0_67 = arith.constant 0 : index
    %218 = vector.load %arg2[%c0_66, %c0_67] : memref<128x512xf32, #tpu.memory_space<vmem>>, vector<128x512xf32>
    %cst_68 = arith.constant dense<0.000000e+00> : vector<8x512xf32>
    %219 = tpu.matmul %210, %218, %cst_68 {dimension_numbers = #tpu.dot_dimension_numbers<[1], [0], [0], [1], [0, 0, 1, 1], [], []>} : vector<8x128xf32>, vector<128x512xf32>, vector<8x512xf32> -> vector<8x512xf32>
    %220 = arith.addf %217, %219 : vector<8x512xf32>
    %221 = vector.extract_strided_slice %220 {offsets = [0, 0], sizes = [8, 128], strides = [1, 1]} : vector<8x512xf32> to vector<8x128xf32>
    %222 = arith.negf %221 : vector<8x128xf32>
    %223 = math.exp %222 : vector<8x128xf32>
    %cst_69 = arith.constant 1.000000e+00 : f32
    %224 = vector.broadcast %cst_69 : f32 to vector<8x128xf32>
    %225 = arith.addf %224, %223 : vector<8x128xf32>
    %226 = arith.divf %224, %225 : vector<8x128xf32>
    %227 = vector.extract_strided_slice %220 {offsets = [0, 128], sizes = [8, 128], strides = [1, 1]} : vector<8x512xf32> to vector<8x128xf32>
    %228 = arith.negf %227 : vector<8x128xf32>
    %229 = math.exp %228 : vector<8x128xf32>
    %cst_70 = arith.constant 1.000000e+00 : f32
    %230 = vector.broadcast %cst_70 : f32 to vector<8x128xf32>
    %231 = arith.addf %230, %229 : vector<8x128xf32>
    %232 = arith.divf %230, %231 : vector<8x128xf32>
    %233 = vector.extract_strided_slice %220 {offsets = [0, 256], sizes = [8, 128], strides = [1, 1]} : vector<8x512xf32> to vector<8x128xf32>
    %234 = math.tanh %233 : vector<8x128xf32>
    %235 = vector.extract_strided_slice %220 {offsets = [0, 384], sizes = [8, 128], strides = [1, 1]} : vector<8x512xf32> to vector<8x128xf32>
    %236 = arith.negf %235 : vector<8x128xf32>
    %237 = math.exp %236 : vector<8x128xf32>
    %cst_71 = arith.constant 1.000000e+00 : f32
    %238 = vector.broadcast %cst_71 : f32 to vector<8x128xf32>
    %239 = arith.addf %238, %237 : vector<8x128xf32>
    %240 = arith.divf %238, %239 : vector<8x128xf32>
    %241 = arith.mulf %232, %208 : vector<8x128xf32>
    %242 = arith.mulf %226, %234 : vector<8x128xf32>
    %243 = arith.addf %241, %242 : vector<8x128xf32>
    %244 = math.tanh %243 : vector<8x128xf32>
    %245 = arith.mulf %240, %244 : vector<8x128xf32>
    %246 = arith.index_cast %c6_i32 : i32 to index
    %c0_72 = arith.constant 0 : index
    %c0_73 = arith.constant 0 : index
    %247 = vector.load %arg3[%246, %c0_72, %c0_73] : memref<8x8x128xf32, #tpu.memory_space<vmem>>, vector<1x8x128xf32>
    %248 = vector.shape_cast %247 : vector<1x8x128xf32> to vector<8x128xf32>
    %249 = vector.shape_cast %245 : vector<8x128xf32> to vector<1x8x128xf32>
    tpu.vector_store %arg3[%246, %c0_72, %c0_73], %249 {strides = array<i32>} : memref<8x8x128xf32, #tpu.memory_space<vmem>>, vector<1x8x128xf32>,
    %c7_i32 = arith.constant 7 : i32
    %250 = arith.index_cast %c7_i32 : i32 to index
    %c0_74 = arith.constant 0 : index
    %c0_75 = arith.constant 0 : index
    %251 = vector.load %arg1[%250, %c0_74, %c0_75] : memref<8x8x512xf32, #tpu.memory_space<vmem>>, vector<1x8x512xf32>
    %252 = vector.shape_cast %251 : vector<1x8x512xf32> to vector<8x512xf32>
    %c0_76 = arith.constant 0 : index
    %c0_77 = arith.constant 0 : index
    %253 = vector.load %arg2[%c0_76, %c0_77] : memref<128x512xf32, #tpu.memory_space<vmem>>, vector<128x512xf32>
    %cst_78 = arith.constant dense<0.000000e+00> : vector<8x512xf32>
    %254 = tpu.matmul %245, %253, %cst_78 {dimension_numbers = #tpu.dot_dimension_numbers<[1], [0], [0], [1], [0, 0, 1, 1], [], []>} : vector<8x128xf32>, vector<128x512xf32>, vector<8x512xf32> -> vector<8x512xf32>
    %255 = arith.addf %252, %254 : vector<8x512xf32>
    %256 = vector.extract_strided_slice %255 {offsets = [0, 0], sizes = [8, 128], strides = [1, 1]} : vector<8x512xf32> to vector<8x128xf32>
    %257 = arith.negf %256 : vector<8x128xf32>
    %258 = math.exp %257 : vector<8x128xf32>
    %cst_79 = arith.constant 1.000000e+00 : f32
    %259 = vector.broadcast %cst_79 : f32 to vector<8x128xf32>
    %260 = arith.addf %259, %258 : vector<8x128xf32>
    %261 = arith.divf %259, %260 : vector<8x128xf32>
    %262 = vector.extract_strided_slice %255 {offsets = [0, 128], sizes = [8, 128], strides = [1, 1]} : vector<8x512xf32> to vector<8x128xf32>
    %263 = arith.negf %262 : vector<8x128xf32>
    %264 = math.exp %263 : vector<8x128xf32>
    %cst_80 = arith.constant 1.000000e+00 : f32
    %265 = vector.broadcast %cst_80 : f32 to vector<8x128xf32>
    %266 = arith.addf %265, %264 : vector<8x128xf32>
    %267 = arith.divf %265, %266 : vector<8x128xf32>
    %268 = vector.extract_strided_slice %255 {offsets = [0, 256], sizes = [8, 128], strides = [1, 1]} : vector<8x512xf32> to vector<8x128xf32>
    %269 = math.tanh %268 : vector<8x128xf32>
    %270 = vector.extract_strided_slice %255 {offsets = [0, 384], sizes = [8, 128], strides = [1, 1]} : vector<8x512xf32> to vector<8x128xf32>
    %271 = arith.negf %270 : vector<8x128xf32>
    %272 = math.exp %271 : vector<8x128xf32>
    %cst_81 = arith.constant 1.000000e+00 : f32
    %273 = vector.broadcast %cst_81 : f32 to vector<8x128xf32>
    %274 = arith.addf %273, %272 : vector<8x128xf32>
    %275 = arith.divf %273, %274 : vector<8x128xf32>
    %276 = arith.mulf %267, %243 : vector<8x128xf32>
    %277 = arith.mulf %261, %269 : vector<8x128xf32>
    %278 = arith.addf %276, %277 : vector<8x128xf32>
    %279 = math.tanh %278 : vector<8x128xf32>
    %280 = arith.mulf %275, %279 : vector<8x128xf32>
    %281 = arith.index_cast %c7_i32 : i32 to index
    %c0_82 = arith.constant 0 : index
    %c0_83 = arith.constant 0 : index
    %282 = vector.load %arg3[%281, %c0_82, %c0_83] : memref<8x8x128xf32, #tpu.memory_space<vmem>>, vector<1x8x128xf32>
    %283 = vector.shape_cast %282 : vector<1x8x128xf32> to vector<8x128xf32>
    %284 = vector.shape_cast %280 : vector<8x128xf32> to vector<1x8x128xf32>
    tpu.vector_store %arg3[%281, %c0_82, %c0_83], %284 {strides = array<i32>} : memref<8x8x128xf32, #tpu.memory_space<vmem>>, vector<1x8x128xf32>,
    %c8_i32 = arith.constant 8 : i32
    %c0_84 = arith.constant 0 : index
    %c0_85 = arith.constant 0 : index
    %285 = vector.load %arg6[%c0_84, %c0_85] : memref<8x128xf32, #tpu.memory_space<vmem>>, vector<8x128xf32>
    tpu.vector_store %arg6[%c0_84, %c0_85], %280 {strides = array<i32>} : memref<8x128xf32, #tpu.memory_space<vmem>>, vector<8x128xf32>,
    %c0_86 = arith.constant 0 : index
    %c0_87 = arith.constant 0 : index
    %286 = vector.load %arg7[%c0_86, %c0_87] : memref<8x128xf32, #tpu.memory_space<vmem>>, vector<8x128xf32>
    tpu.vector_store %arg7[%c0_86, %c0_87], %278 {strides = array<i32>} : memref<8x128xf32, #tpu.memory_space<vmem>>, vector<8x128xf32>,
    %c0_i32_88 = arith.constant 0 : i32
    %287 = arith.cmpi eq, %arg0, %c0_i32_88 : i32
    %288 = arith.extui %287 : i1 to i32
    %c0_i32_89 = arith.constant 0 : i32
    %289 = arith.cmpi ne, %288, %c0_i32_89 : i32
    scf.if %289 {
      %c0_90 = arith.constant 0 : index
      %c0_91 = arith.constant 0 : index
      %290 = vector.load %arg4[%c0_90, %c0_91] : memref<8x128xf32, #tpu.memory_space<vmem>>, vector<8x128xf32>
      tpu.vector_store %arg4[%c0_90, %c0_91], %280 {strides = array<i32>} : memref<8x128xf32, #tpu.memory_space<vmem>>, vector<8x128xf32>,
      %c0_92 = arith.constant 0 : index
      %c0_93 = arith.constant 0 : index
      %291 = vector.load %arg5[%c0_92, %c0_93] : memref<8x128xf32, #tpu.memory_space<vmem>>, vector<8x128xf32>
      tpu.vector_store %arg5[%c0_92, %c0_93], %278 {strides = array<i32>} : memref<8x128xf32, #tpu.memory_space<vmem>>, vector<8x128xf32>,
    } else {
    }
    return
  }
  func.func @transform_0(%arg0: i32) -> (i32, i32, i32) {
    %c0_i32 = arith.constant 0 : i32
    %c0_i32_0 = arith.constant 0 : i32
    %c0_i32_1 = arith.constant 0 : i32
    return %arg0, %c0_i32, %c0_i32_0 : i32, i32, i32
  }
  func.func @transform_1(%arg0: i32) -> (i32, i32) {
    %c0_i32 = arith.constant 0 : i32
    %c0_i32_0 = arith.constant 0 : i32
    %c0_i32_1 = arith.constant 0 : i32
    return %c0_i32, %c0_i32_0 : i32, i32
  }
  func.func @transform_2(%arg0: i32) -> (i32, i32, i32) {
    %c0_i32 = arith.constant 0 : i32
    %c0_i32_0 = arith.constant 0 : i32
    %c0_i32_1 = arith.constant 0 : i32
    return %arg0, %c0_i32, %c0_i32_0 : i32, i32, i32
  }
  func.func @transform_3(%arg0: i32) -> (i32, i32) {
    %c0_i32 = arith.constant 0 : i32
    %c0_i32_0 = arith.constant 0 : i32
    %c0_i32_1 = arith.constant 0 : i32
    return %c0_i32, %c0_i32_0 : i32, i32
  }
  func.func @transform_4(%arg0: i32) -> (i32, i32) {
    %c0_i32 = arith.constant 0 : i32
    %c0_i32_0 = arith.constant 0 : i32
    %c0_i32_1 = arith.constant 0 : i32
    return %c0_i32, %c0_i32_0 : i32, i32
  }
}

</mosaic_0001>

<llo_original>
// kernel: tpu_custom_call.1
$region0: #{tpu_custom_call.1}
  #allocation0 [shape = 'u32[]', space=smem, size = 0x4, offset = 0x4, fixed_abs, tag = 'smem constant byte address 0x4 - core index']
  #allocation1 [shape = 'u32[72,128]{1,0:T(1,128)}', space=vmem, size = 0x9000, scoped, tag = 'internal scratch']
  #allocation2 [shape = 'f32[8,128]{1,0:T(8,128)}', space=vmem, size = 0x1000, scoped, tag = 'scratch operand']
  #allocation3 [shape = 'f32[8,128]{1,0:T(8,128)}', space=vmem, size = 0x1000, scoped, tag = 'scratch operand']
  %s0 = inlined_call_operand.hbm [shape: f32[8,8,512], index: 0, kind: input, shape index: {}]
  %s1 = inlined_call_operand.hbm [shape: f32[128,512], index: 1, kind: input, shape index: {}]
  %s2 = inlined_call_operand.hbm [shape: f32[8,8,128], index: 2, kind: output, shape index: {0}]
  %s3 = inlined_call_operand.hbm [shape: f32[8,128], index: 3, kind: output, shape index: {1}]
  %s4 = inlined_call_operand.hbm [shape: f32[8,128], index: 4, kind: output, shape index: {2}]
  %5 = xla_tuple %s2, %s3, %s4
  %s6 = sld [smem:[#allocation0]]
  $region50: #{tpu_custom_call.1} parent=0
    _
  %s8 = ssub.s32 1, %s6
  %s9 = scalar_select 0, %s8, %s6
  $region1: #{tpu_custom_call.1} parent=0
    #allocation4 [shape = 'u8[131072]{0}', space=vmem, size = 0x20000, scoped, tag = 'input window, operand 0, single buffered']
    #allocation5 [shape = 's32[1]{0}', space=sflag, size = 0x4, scoped, tag = 'scoped memory for tpu_custom_call.1']
    #allocation6 [shape = 's32[1]{0}', space=sflag, size = 0x4, scoped, tag = 'scoped memory for tpu_custom_call.1']
    #allocation7 [shape = 'u8[262144]{0}', space=vmem, size = 0x40000, scoped, tag = 'input window, operand 1, single buffered']
    #allocation8 [shape = 's32[1]{0}', space=sflag, size = 0x4, scoped, tag = 'scoped memory for tpu_custom_call.1']
    #allocation9 [shape = 'u8[32768]{0}', space=vmem, size = 0x8000, scoped, tag = 'output window, operand 0, single buffered']
    #allocation10 [shape = 'u8[4096]{0}', space=vmem, size = 0x1000, scoped, tag = 'output window, operand 1, single buffered']
    #allocation11 [shape = 's32[1]{0}', space=sflag, size = 0x4, scoped, tag = 'scoped memory for tpu_custom_call.1']
    #allocation12 [shape = 'u8[4096]{0}', space=vmem, size = 0x1000, scoped, tag = 'output window, operand 2, single buffered']
    %10 = vsyncpa [#allocation5], 0
    %11 = vsyncpa [#allocation8], 0
    %12 = vsyncpa [#allocation6], 0
    %13 = vsyncpa [#allocation11], 0
    // Predicated region
    $region2: #{tpu_custom_call.1} parent=1 // pred_check
      _
    $region3: #{tpu_custom_call.1} parent=1 // pred_check_branch
      %15 = sbr.rel (0) target = $region5
    $region4: #{tpu_custom_call.1} parent=1 // pred_region
      %17 = vsyncadd [#allocation5], 0
      %s18 = sshll.u32 %s0, 4
      %s19 = int_to_ptr.hbm [resolvable:$true] %s18
      %s20 = sshll.u32 [#allocation4], 4
      %s21 = int_to_ptr.vmem [resolvable:$true] %s20
      %26 = dma.hbm_to_vmem [thread:$0]  %s19, 4096, %s21, [#allocation5], 512, 512, 32
    $region5: #{tpu_custom_call.1} parent=1 // pred_fallthru
      _
    // Predicated region
    $region6: #{tpu_custom_call.1} parent=1 // pred_check
      _
    $region7: #{tpu_custom_call.1} parent=1 // pred_check_branch
      %28 = sbr.rel (0) target = $region9
    $region8: #{tpu_custom_call.1} parent=1 // pred_region
      %30 = vsyncadd [#allocation8], 0
      %s31 = sshll.u32 %s1, 4
      %s32 = int_to_ptr.hbm [resolvable:$true] %s31
      %s33 = sshll.u32 [#allocation7], 4
      %s34 = int_to_ptr.vmem [resolvable:$true] %s33
      %39 = dma.hbm_to_vmem [thread:$0]  %s32, 8192, %s34, [#allocation8], 512, 512, 32
    $region9: #{tpu_custom_call.1} parent=1 // pred_fallthru
      _
    // Predicated region
    $region10: #{tpu_custom_call.1} parent=1 // pred_check
      _
    $region11: #{tpu_custom_call.1} parent=1 // pred_check_branch
      %41 = sbr.rel (0) target = $region13
    $region12: #{tpu_custom_call.1} parent=1 // pred_region
      %43 = dma.done [#allocation5], 4096
    $region13: #{tpu_custom_call.1} parent=1 // pred_fallthru
      _
    // Predicated region
    $region14: #{tpu_custom_call.1} parent=1 // pred_check
      _
    $region15: #{tpu_custom_call.1} parent=1 // pred_check_branch
      %45 = sbr.rel (0) target = $region17
    $region16: #{tpu_custom_call.1} parent=1 // pred_region
      %47 = dma.done [#allocation8], 8192
    $region17: #{tpu_custom_call.1} parent=1 // pred_fallthru
      _
    %p48 = scmp.eq.s32.totalorder 0, 0
    // Predicated region
    $region18: #{tpu_custom_call.1} parent=1 // pred_check
      %p49 = pneg %p48
    $region19: #{tpu_custom_call.1} parent=1 // pred_check_branch
      %51 = sbr.rel (%p49) target = $region21
    $region20: #{tpu_custom_call.1} parent=1 // pred_region
      %52 = vst [vmem:[#allocation2] sm:$0xff] 0.0
      %53 = vst [vmem:[#allocation3] sm:$0xff] 0.0
    $region21: #{tpu_custom_call.1} parent=1 // pred_fallthru
      _
    %v54 = vld [vmem:[#allocation2] sm:$0xff]
    %v55 = vld [vmem:[#allocation3] sm:$0xff]
    %v56 = vld [vmem:[#allocation4] sm:$0xff]
    %v57 = vld [vmem:[#allocation4 + $0x8] sm:$0xff]
    %v58 = vld [vmem:[#allocation4 + $0x10] sm:$0xff]
    %v59 = vld [vmem:[#allocation4 + $0x18] sm:$0xff]
    %v60 = vld [vmem:[#allocation7] sm:$0xff]
    %v61 = vld [vmem:[#allocation7 + $0x8] sm:$0xff]
    %v62 = vld [vmem:[#allocation7 + $0x10] sm:$0xff]
    %v63 = vld [vmem:[#allocation7 + $0x18] sm:$0xff]
    %v64 = vld [vmem:[#allocation7 + $0x20] sm:$0xff]
    %v65 = vld [vmem:[#allocation7 + $0x28] sm:$0xff]
    %v66 = vld [vmem:[#allocation7 + $0x30] sm:$0xff]
    %v67 = vld [vmem:[#allocation7 + $0x38] sm:$0xff]
    %v68 = vld [vmem:[#allocation7 + $0x40] sm:$0xff]
    %v69 = vld [vmem:[#allocation7 + $0x48] sm:$0xff]
    %v70 = vld [vmem:[#allocation7 + $0x50] sm:$0xff]
    %v71 = vld [vmem:[#allocation7 + $0x58] sm:$0xff]
    %v72 = vld [vmem:[#allocation7 + $0x60] sm:$0xff]
    %v73 = vld [vmem:[#allocation7 + $0x68] sm:$0xff]
    %v74 = vld [vmem:[#allocation7 + $0x70] sm:$0xff]
    %v75 = vld [vmem:[#allocation7 + $0x78] sm:$0xff]
    %v76 = vld [vmem:[#allocation7 + $0x80] sm:$0xff]
    %v77 = vld [vmem:[#allocation7 + $0x88] sm:$0xff]
    %v78 = vld [vmem:[#allocation7 + $0x90] sm:$0xff]
    %v79 = vld [vmem:[#allocation7 + $0x98] sm:$0xff]
    %v80 = vld [vmem:[#allocation7 + $0xa0] sm:$0xff]
    %v81 = vld [vmem:[#allocation7 + $0xa8] sm:$0xff]
    %v82 = vld [vmem:[#allocation7 + $0xb0] sm:$0xff]
    %v83 = vld [vmem:[#allocation7 + $0xb8] sm:$0xff]
    %v84 = vld [vmem:[#allocation7 + $0xc0] sm:$0xff]
    %v85 = vld [vmem:[#allocation7 + $0xc8] sm:$0xff]
    %v86 = vld [vmem:[#allocation7 + $0xd0] sm:$0xff]
    %v87 = vld [vmem:[#allocation7 + $0xd8] sm:$0xff]
    %v88 = vld [vmem:[#allocation7 + $0xe0] sm:$0xff]
    %v89 = vld [vmem:[#allocation7 + $0xe8] sm:$0xff]
    %v90 = vld [vmem:[#allocation7 + $0xf0] sm:$0xff]
    %v91 = vld [vmem:[#allocation7 + $0xf8] sm:$0xff]
    %v92 = vld [vmem:[#allocation7 + $0x100] sm:$0xff]
    %v93 = vld [vmem:[#allocation7 + $0x108] sm:$0xff]
    %v94 = vld [vmem:[#allocation7 + $0x110] sm:$0xff]
    %v95 = vld [vmem:[#allocation7 + $0x118] sm:$0xff]
    %v96 = vld [vmem:[#allocation7 + $0x120] sm:$0xff]
    %v97 = vld [vmem:[#allocation7 + $0x128] sm:$0xff]
    %v98 = vld [vmem:[#allocation7 + $0x130] sm:$0xff]
    %v99 = vld [vmem:[#allocation7 + $0x138] sm:$0xff]
    %v100 = vld [vmem:[#allocation7 + $0x140] sm:$0xff]
    %v101 = vld [vmem:[#allocation7 + $0x148] sm:$0xff]
    %v102 = vld [vmem:[#allocation7 + $0x150] sm:$0xff]
    %v103 = vld [vmem:[#allocation7 + $0x158] sm:$0xff]
    %v104 = vld [vmem:[#allocation7 + $0x160] sm:$0xff]
    %v105 = vld [vmem:[#allocation7 + $0x168] sm:$0xff]
    %v106 = vld [vmem:[#allocation7 + $0x170] sm:$0xff]
    %v107 = vld [vmem:[#allocation7 + $0x178] sm:$0xff]
    %v108 = vld [vmem:[#allocation7 + $0x180] sm:$0xff]
    %v109 = vld [vmem:[#allocation7 + $0x188] sm:$0xff]
    %v110 = vld [vmem:[#allocation7 + $0x190] sm:$0xff]
    %v111 = vld [vmem:[#allocation7 + $0x198] sm:$0xff]
    %v112 = vld [vmem:[#allocation7 + $0x1a0] sm:$0xff]
    %v113 = vld [vmem:[#allocation7 + $0x1a8] sm:$0xff]
    %v114 = vld [vmem:[#allocation7 + $0x1b0] sm:$0xff]
    %v115 = vld [vmem:[#allocation7 + $0x1b8] sm:$0xff]
    %v116 = vld [vmem:[#allocation7 + $0x1c0] sm:$0xff]
    %v117 = vld [vmem:[#allocation7 + $0x1c8] sm:$0xff]
    %v118 = vld [vmem:[#allocation7 + $0x1d0] sm:$0xff]
    %v119 = vld [vmem:[#allocation7 + $0x1d8] sm:$0xff]
    %v120 = vld [vmem:[#allocation7 + $0x1e0] sm:$0xff]
    %v121 = vld [vmem:[#allocation7 + $0x1e8] sm:$0xff]
    %v122 = vld [vmem:[#allocation7 + $0x1f0] sm:$0xff]
    %v123 = vld [vmem:[#allocation7 + $0x1f8] sm:$0xff]
    %124 = vmatpush.msra.mxu0 %v120
    %125 = vmatpush.msra.mxu0 %v116
    %126 = vmatpush.msra.mxu0 %v112
    %127 = vmatpush.msra.mxu0 %v108
    %128 = vmatpush.msra.mxu0 %v104
    %129 = vmatpush.msra.mxu0 %v100
    %130 = vmatpush.msra.mxu0 %v96
    %131 = vmatpush.msra.mxu0 %v92
    %132 = vmatpush.msra.mxu0 %v88
    %133 = vmatpush.msra.mxu0 %v84
    %134 = vmatpush.msra.mxu0 %v80
    %135 = vmatpush.msra.mxu0 %v76
    %136 = vmatpush.msra.mxu0 %v72
    %137 = vmatpush.msra.mxu0 %v68
    %138 = vmatpush.msra.mxu0 %v64
    %139 = vmatpush.msra.mxu0 %v60
    %140 = vmatmul.f32.gmra.mxu0 %v54
    %v141 = vpop.f32.mrf.mxu0
    %v142 = vadd.f32 0.0, %v141
    %143 = vdwg.mxu0
    %144 = vmatpush.msra.mxu0 %v121
    %145 = vmatpush.msra.mxu0 %v117
    %146 = vmatpush.msra.mxu0 %v113
    %147 = vmatpush.msra.mxu0 %v109
    %148 = vmatpush.msra.mxu0 %v105
    %149 = vmatpush.msra.mxu0 %v101
    %150 = vmatpush.msra.mxu0 %v97
    %151 = vmatpush.msra.mxu0 %v93
    %152 = vmatpush.msra.mxu0 %v89
    %153 = vmatpush.msra.mxu0 %v85
    %154 = vmatpush.msra.mxu0 %v81
    %155 = vmatpush.msra.mxu0 %v77
    %156 = vmatpush.msra.mxu0 %v73
    %157 = vmatpush.msra.mxu0 %v69
    %158 = vmatpush.msra.mxu0 %v65
    %159 = vmatpush.msra.mxu0 %v61
    %160 = vmatmul.f32.gmra.mxu0 %v54
    %v161 = vpop.f32.mrf.mxu0
    %v162 = vadd.f32 0.0, %v161
    %163 = vdwg.mxu0
    %164 = vmatpush.msra.mxu0 %v122
    %165 = vmatpush.msra.mxu0 %v118
    %166 = vmatpush.msra.mxu0 %v114
    %167 = vmatpush.msra.mxu0 %v110
    %168 = vmatpush.msra.mxu0 %v106
    %169 = vmatpush.msra.mxu0 %v102
    %170 = vmatpush.msra.mxu0 %v98
    %171 = vmatpush.msra.mxu0 %v94
    %172 = vmatpush.msra.mxu0 %v90
    %173 = vmatpush.msra.mxu0 %v86
    %174 = vmatpush.msra.mxu0 %v82
    %175 = vmatpush.msra.mxu0 %v78
    %176 = vmatpush.msra.mxu0 %v74
    %177 = vmatpush.msra.mxu0 %v70
    %178 = vmatpush.msra.mxu0 %v66
    %179 = vmatpush.msra.mxu0 %v62
    %180 = vmatmul.f32.gmra.mxu0 %v54
    %v181 = vpop.f32.mrf.mxu0
    %v182 = vadd.f32 0.0, %v181
    %183 = vdwg.mxu0
    %184 = vmatpush.msra.mxu0 %v123
    %185 = vmatpush.msra.mxu0 %v119
    %186 = vmatpush.msra.mxu0 %v115
    %187 = vmatpush.msra.mxu0 %v111
    %188 = vmatpush.msra.mxu0 %v107
    %189 = vmatpush.msra.mxu0 %v103
    %190 = vmatpush.msra.mxu0 %v99
    %191 = vmatpush.msra.mxu0 %v95
    %192 = vmatpush.msra.mxu0 %v91
    %193 = vmatpush.msra.mxu0 %v87
    %194 = vmatpush.msra.mxu0 %v83
    %195 = vmatpush.msra.mxu0 %v79
    %196 = vmatpush.msra.mxu0 %v75
    %197 = vmatpush.msra.mxu0 %v71
    %198 = vmatpush.msra.mxu0 %v67
    %199 = vmatpush.msra.mxu0 %v63
    %200 = vmatmul.f32.gmra.mxu0 %v54
    %v201 = vpop.f32.mrf.mxu0
    %v202 = vadd.f32 0.0, %v201
    %203 = vdwg.mxu0
    %v204 = vadd.f32 %v56, %v142
    %v205 = vadd.f32 %v57, %v162
    %v206 = vadd.f32 %v58, %v182
    %v207 = vadd.f32 %v59, %v202
    %v208 = vxor.u32 %v204, 2147483648
    %v209 = vmul.f32 %v208, 1.442695
    %v210 = vpow.pop %v209
    %v211 = vadd.f32 %v210, 1.0
    %v212 = vrcp.pop %v211
    %v213 = vmul.f32 %v211, %v212
    %v214 = vsub.f32 1.0, %v213
    %v215 = vmul.f32 %v212, %v214
    %v216 = vadd.f32 %v212, %v215
    %vm217 = vweird.f32 %v211
    %vm218 = vweird.f32 %v212
    %vm219 = vmor %vm217, %vm218
    %v220 = vsel %vm219, %v212, %v216
    %v221 = vand.u32 2147483647, %v211
    %vm222 = vcmp.eq.f32.partialorder %v221, 8.507059e+37
    %v223 = vand.u32 %v211, 2147483648
    %v224 = vor.u32 1.1754944e-38, %v223
    %v225 = vsel %vm222, %v224, %v220
    %v226 = vmul.f32 1.0, %v225
    %v227 = vxor.u32 %v205, 2147483648
    %v228 = vmul.f32 %v227, 1.442695
    %v229 = vpow.pop %v228
    %v230 = vadd.f32 %v229, 1.0
    %v231 = vrcp.pop %v230
    %v232 = vmul.f32 %v230, %v231
    %v233 = vsub.f32 1.0, %v232
    %v234 = vmul.f32 %v231, %v233
    %v235 = vadd.f32 %v231, %v234
    %vm236 = vweird.f32 %v230
    %vm237 = vweird.f32 %v231
    %vm238 = vmor %vm236, %vm237
    %v239 = vsel %vm238, %v231, %v235
    %v240 = vand.u32 2147483647, %v230
    %vm241 = vcmp.eq.f32.partialorder %v240, 8.507059e+37
    %v242 = vand.u32 %v230, 2147483648
    %v243 = vor.u32 1.1754944e-38, %v242
    %v244 = vsel %vm241, %v243, %v239
    %v245 = vmul.f32 1.0, %v244
    %v246 = vtanh.pop %v206
    %v247 = vxor.u32 %v207, 2147483648
    %v248 = vmul.f32 %v247, 1.442695
    %v249 = vpow.pop %v248
    %v250 = vadd.f32 %v249, 1.0
    %v251 = vrcp.pop %v250
    %v252 = vmul.f32 %v250, %v251
    %v253 = vsub.f32 1.0, %v252
    %v254 = vmul.f32 %v251, %v253
    %v255 = vadd.f32 %v251, %v254
    %vm256 = vweird.f32 %v250
    %vm257 = vweird.f32 %v251
    %vm258 = vmor %vm256, %vm257
    %v259 = vsel %vm258, %v251, %v255
    %v260 = vand.u32 2147483647, %v250
    %vm261 = vcmp.eq.f32.partialorder %v260, 8.507059e+37
    %v262 = vand.u32 %v250, 2147483648
    %v263 = vor.u32 1.1754944e-38, %v262
    %v264 = vsel %vm261, %v263, %v259
    %v265 = vmul.f32 1.0, %v264
    %v266 = vmul.f32 %v245, %v55
    %v267 = vmul.f32 %v226, %v246
    %v268 = vadd.f32 %v266, %v267
    %v269 = vtanh.pop %v268
    %v270 = vmul.f32 %v265, %v269
    %271 = vst [vmem:[#allocation9] sm:$0xff] %v270
    %s272 = scalar_lea.vmem [#allocation4], 32
    %v273 = vld [vmem:[%s272] sm:$0xff]
    %v274 = vld [vmem:[%s272 + $0x8] sm:$0xff]
    %v275 = vld [vmem:[%s272 + $0x10] sm:$0xff]
    %v276 = vld [vmem:[%s272 + $0x18] sm:$0xff]
    %v277 = vld [vmem:[#allocation7] sm:$0xff]
    %v278 = vld [vmem:[#allocation7 + $0x8] sm:$0xff]
    %v279 = vld [vmem:[#allocation7 + $0x10] sm:$0xff]
    %v280 = vld [vmem:[#allocation7 + $0x18] sm:$0xff]
    %v281 = vld [vmem:[#allocation7 + $0x20] sm:$0xff]
    %v282 = vld [vmem:[#allocation7 + $0x28] sm:$0xff]
    %v283 = vld [vmem:[#allocation7 + $0x30] sm:$0xff]
    %v284 = vld [vmem:[#allocation7 + $0x38] sm:$0xff]
    %v285 = vld [vmem:[#allocation7 + $0x40] sm:$0xff]
    %v286 = vld [vmem:[#allocation7 + $0x48] sm:$0xff]
    %v287 = vld [vmem:[#allocation7 + $0x50] sm:$0xff]
    %v288 = vld [vmem:[#allocation7 + $0x58] sm:$0xff]
    %v289 = vld [vmem:[#allocation7 + $0x60] sm:$0xff]
    %v290 = vld [vmem:[#allocation7 + $0x68] sm:$0xff]
    %v291 = vld [vmem:[#allocation7 + $0x70] sm:$0xff]
    %v292 = vld [vmem:[#allocation7 + $0x78] sm:$0xff]
    %v293 = vld [vmem:[#allocation7 + $0x80] sm:$0xff]
    %v294 = vld [vmem:[#allocation7 + $0x88] sm:$0xff]
    %v295 = vld [vmem:[#allocation7 + $0x90] sm:$0xff]
    %v296 = vld [vmem:[#allocation7 + $0x98] sm:$0xff]
    %v297 = vld [vmem:[#allocation7 + $0xa0] sm:$0xff]
    %v298 = vld [vmem:[#allocation7 + $0xa8] sm:$0xff]
    %v299 = vld [vmem:[#allocation7 + $0xb0] sm:$0xff]
    %v300 = vld [vmem:[#allocation7 + $0xb8] sm:$0xff]
    %v301 = vld [vmem:[#allocation7 + $0xc0] sm:$0xff]
    %v302 = vld [vmem:[#allocation7 + $0xc8] sm:$0xff]
    %v303 = vld [vmem:[#allocation7 + $0xd0] sm:$0xff]
    %v304 = vld [vmem:[#allocation7 + $0xd8] sm:$0xff]
    %v305 = vld [vmem:[#allocation7 + $0xe0] sm:$0xff]
    %v306 = vld [vmem:[#allocation7 + $0xe8] sm:$0xff]
    %v307 = vld [vmem:[#allocation7 + $0xf0] sm:$0xff]
    %v308 = vld [vmem:[#allocation7 + $0xf8] sm:$0xff]
    %v309 = vld [vmem:[#allocation7 + $0x100] sm:$0xff]
    %v310 = vld [vmem:[#allocation7 + $0x108] sm:$0xff]
    %v311 = vld [vmem:[#allocation7 + $0x110] sm:$0xff]
    %v312 = vld [vmem:[#allocation7 + $0x118] sm:$0xff]
    %v313 = vld [vmem:[#allocation7 + $0x120] sm:$0xff]
    %v314 = vld [vmem:[#allocation7 + $0x128] sm:$0xff]
    %v315 = vld [vmem:[#allocation7 + $0x130] sm:$0xff]
    %v316 = vld [vmem:[#allocation7 + $0x138] sm:$0xff]
    %v317 = vld [vmem:[#allocation7 + $0x140] sm:$0xff]
    %v318 = vld [vmem:[#allocation7 + $0x148] sm:$0xff]
    %v319 = vld [vmem:[#allocation7 + $0x150] sm:$0xff]
    %v320 = vld [vmem:[#allocation7 + $0x158] sm:$0xff]
    %v321 = vld [vmem:[#allocation7 + $0x160] sm:$0xff]
    %v322 = vld [vmem:[#allocation7 + $0x168] sm:$0xff]
    %v323 = vld [vmem:[#allocation7 + $0x170] sm:$0xff]
    %v324 = vld [vmem:[#allocation7 + $0x178] sm:$0xff]
    %v325 = vld [vmem:[#allocation7 + $0x180] sm:$0xff]
    %v326 = vld [vmem:[#allocation7 + $0x188] sm:$0xff]
    %v327 = vld [vmem:[#allocation7 + $0x190] sm:$0xff]
    %v328 = vld [vmem:[#allocation7 + $0x198] sm:$0xff]
    %v329 = vld [vmem:[#allocation7 + $0x1a0] sm:$0xff]
    %v330 = vld [vmem:[#allocation7 + $0x1a8] sm:$0xff]
    %v331 = vld [vmem:[#allocation7 + $0x1b0] sm:$0xff]
    %v332 = vld [vmem:[#allocation7 + $0x1b8] sm:$0xff]
    %v333 = vld [vmem:[#allocation7 + $0x1c0] sm:$0xff]
    %v334 = vld [vmem:[#allocation7 + $0x1c8] sm:$0xff]
    %v335 = vld [vmem:[#allocation7 + $0x1d0] sm:$0xff]
    %v336 = vld [vmem:[#allocation7 + $0x1d8] sm:$0xff]
    %v337 = vld [vmem:[#allocation7 + $0x1e0] sm:$0xff]
    %v338 = vld [vmem:[#allocation7 + $0x1e8] sm:$0xff]
    %v339 = vld [vmem:[#allocation7 + $0x1f0] sm:$0xff]
    %v340 = vld [vmem:[#allocation7 + $0x1f8] sm:$0xff]
    %341 = vmatpush.msra.mxu0 %v337
    %342 = vmatpush.msra.mxu0 %v333
    %343 = vmatpush.msra.mxu0 %v329
    %344 = vmatpush.msra.mxu0 %v325
    %345 = vmatpush.msra.mxu0 %v321
    %346 = vmatpush.msra.mxu0 %v317
    %347 = vmatpush.msra.mxu0 %v313
    %348 = vmatpush.msra.mxu0 %v309
    %349 = vmatpush.msra.mxu0 %v305
    %350 = vmatpush.msra.mxu0 %v301
    %351 = vmatpush.msra.mxu0 %v297
    %352 = vmatpush.msra.mxu0 %v293
    %353 = vmatpush.msra.mxu0 %v289
    %354 = vmatpush.msra.mxu0 %v285
    %355 = vmatpush.msra.mxu0 %v281
    %356 = vmatpush.msra.mxu0 %v277
    %357 = vmatmul.f32.gmra.mxu0 %v270
    %v358 = vpop.f32.mrf.mxu0
    %v359 = vadd.f32 0.0, %v358
    %360 = vdwg.mxu0
    %361 = vmatpush.msra.mxu0 %v338
    %362 = vmatpush.msra.mxu0 %v334
    %363 = vmatpush.msra.mxu0 %v330
    %364 = vmatpush.msra.mxu0 %v326
    %365 = vmatpush.msra.mxu0 %v322
    %366 = vmatpush.msra.mxu0 %v318
    %367 = vmatpush.msra.mxu0 %v314
    %368 = vmatpush.msra.mxu0 %v310
    %369 = vmatpush.msra.mxu0 %v306
    %370 = vmatpush.msra.mxu0 %v302
    %371 = vmatpush.msra.mxu0 %v298
    %372 = vmatpush.msra.mxu0 %v294
    %373 = vmatpush.msra.mxu0 %v290
    %374 = vmatpush.msra.mxu0 %v286
    %375 = vmatpush.msra.mxu0 %v282
    %376 = vmatpush.msra.mxu0 %v278
    %377 = vmatmul.f32.gmra.mxu0 %v270
    %v378 = vpop.f32.mrf.mxu0
    %v379 = vadd.f32 0.0, %v378
    %380 = vdwg.mxu0
    %381 = vmatpush.msra.mxu0 %v339
    %382 = vmatpush.msra.mxu0 %v335
    %383 = vmatpush.msra.mxu0 %v331
    %384 = vmatpush.msra.mxu0 %v327
    %385 = vmatpush.msra.mxu0 %v323
    %386 = vmatpush.msra.mxu0 %v319
    %387 = vmatpush.msra.mxu0 %v315
    %388 = vmatpush.msra.mxu0 %v311
    %389 = vmatpush.msra.mxu0 %v307
    %390 = vmatpush.msra.mxu0 %v303
    %391 = vmatpush.msra.mxu0 %v299
    %392 = vmatpush.msra.mxu0 %v295
    %393 = vmatpush.msra.mxu0 %v291
    %394 = vmatpush.msra.mxu0 %v287
    %395 = vmatpush.msra.mxu0 %v283
    %396 = vmatpush.msra.mxu0 %v279
    %397 = vmatmul.f32.gmra.mxu0 %v270
    %v398 = vpop.f32.mrf.mxu0
    %v399 = vadd.f32 0.0, %v398
    %400 = vdwg.mxu0
    %401 = vmatpush.msra.mxu0 %v340
    %402 = vmatpush.msra.mxu0 %v336
    %403 = vmatpush.msra.mxu0 %v332
    %404 = vmatpush.msra.mxu0 %v328
    %405 = vmatpush.msra.mxu0 %v324
    %406 = vmatpush.msra.mxu0 %v320
    %407 = vmatpush.msra.mxu0 %v316
    %408 = vmatpush.msra.mxu0 %v312
    %409 = vmatpush.msra.mxu0 %v308
    %410 = vmatpush.msra.mxu0 %v304
    %411 = vmatpush.msra.mxu0 %v300
    %412 = vmatpush.msra.mxu0 %v296
    %413 = vmatpush.msra.mxu0 %v292
    %414 = vmatpush.msra.mxu0 %v288
    %415 = vmatpush.msra.mxu0 %v284
    %416 = vmatpush.msra.mxu0 %v280
    %417 = vmatmul.f32.gmra.mxu0 %v270
    %v418 = vpop.f32.mrf.mxu0
    %v419 = vadd.f32 0.0, %v418
    %420 = vdwg.mxu0
    %v421 = vadd.f32 %v273, %v359
    %v422 = vadd.f32 %v274, %v379
    %v423 = vadd.f32 %v275, %v399
    %v424 = vadd.f32 %v276, %v419
    %v425 = vxor.u32 %v421, 2147483648
    %v426 = vmul.f32 %v425, 1.442695
    %v427 = vpow.pop %v426
    %v428 = vadd.f32 %v427, 1.0
    %v429 = vrcp.pop %v428
    %v430 = vmul.f32 %v428, %v429
    %v431 = vsub.f32 1.0, %v430
    %v432 = vmul.f32 %v429, %v431
    %v433 = vadd.f32 %v429, %v432
    %vm434 = vweird.f32 %v428
    %vm435 = vweird.f32 %v429
    %vm436 = vmor %vm434, %vm435
    %v437 = vsel %vm436, %v429, %v433
    %v438 = vand.u32 2147483647, %v428
    %vm439 = vcmp.eq.f32.partialorder %v438, 8.507059e+37
    %v440 = vand.u32 %v428, 2147483648
    %v441 = vor.u32 1.1754944e-38, %v440
    %v442 = vsel %vm439, %v441, %v437
    %v443 = vmul.f32 1.0, %v442
    %v444 = vxor.u32 %v422, 2147483648
    %v445 = vmul.f32 %v444, 1.442695
    %v446 = vpow.pop %v445
    %v447 = vadd.f32 %v446, 1.0
    %v448 = vrcp.pop %v447
    %v449 = vmul.f32 %v447, %v448
    %v450 = vsub.f32 1.0, %v449
    %v451 = vmul.f32 %v448, %v450
    %v452 = vadd.f32 %v448, %v451
    %vm453 = vweird.f32 %v447
    %vm454 = vweird.f32 %v448
    %vm455 = vmor %vm453, %vm454
    %v456 = vsel %vm455, %v448, %v452
    %v457 = vand.u32 2147483647, %v447
    %vm458 = vcmp.eq.f32.partialorder %v457, 8.507059e+37
    %v459 = vand.u32 %v447, 2147483648
    %v460 = vor.u32 1.1754944e-38, %v459
    %v461 = vsel %vm458, %v460, %v456
    %v462 = vmul.f32 1.0, %v461
    %v463 = vtanh.pop %v423
    %v464 = vxor.u32 %v424, 2147483648
    %v465 = vmul.f32 %v464, 1.442695
    %v466 = vpow.pop %v465
    %v467 = vadd.f32 %v466, 1.0
    %v468 = vrcp.pop %v467
    %v469 = vmul.f32 %v467, %v468
    %v470 = vsub.f32 1.0, %v469
    %v471 = vmul.f32 %v468, %v470
    %v472 = vadd.f32 %v468, %v471
    %vm473 = vweird.f32 %v467
    %vm474 = vweird.f32 %v468
    %vm475 = vmor %vm473, %vm474
    %v476 = vsel %vm475, %v468, %v472
    %v477 = vand.u32 2147483647, %v467
    %vm478 = vcmp.eq.f32.partialorder %v477, 8.507059e+37
    %v479 = vand.u32 %v467, 2147483648
    %v480 = vor.u32 1.1754944e-38, %v479
    %v481 = vsel %vm478, %v480, %v476
    %v482 = vmul.f32 1.0, %v481
    %v483 = vmul.f32 %v462, %v268
    %v484 = vmul.f32 %v443, %v463
    %v485 = vadd.f32 %v483, %v484
    %v486 = vtanh.pop %v485
    %v487 = vmul.f32 %v482, %v486
    %s488 = scalar_lea.vmem [#allocation9], 8
    %489 = vst [vmem:[%s488] sm:$0xff] %v487
    %s490 = scalar_lea.vmem [#allocation4], 64
    %v491 = vld [vmem:[%s490] sm:$0xff]
    %v492 = vld [vmem:[%s490 + $0x8] sm:$0xff]
    %v493 = vld [vmem:[%s490 + $0x10] sm:$0xff]
    %v494 = vld [vmem:[%s490 + $0x18] sm:$0xff]
    %v495 = vld [vmem:[#allocation7] sm:$0xff]
    %v496 = vld [vmem:[#allocation7 + $0x8] sm:$0xff]
    %v497 = vld [vmem:[#allocation7 + $0x10] sm:$0xff]
    %v498 = vld [vmem:[#allocation7 + $0x18] sm:$0xff]
    %v499 = vld [vmem:[#allocation7 + $0x20] sm:$0xff]
    %v500 = vld [vmem:[#allocation7 + $0x28] sm:$0xff]
    %v501 = vld [vmem:[#allocation7 + $0x30] sm:$0xff]
    %v502 = vld [vmem:[#allocation7 + $0x38] sm:$0xff]
    %v503 = vld [vmem:[#allocation7 + $0x40] sm:$0xff]
    %v504 = vld [vmem:[#allocation7 + $0x48] sm:$0xff]
    %v505 = vld [vmem:[#allocation7 + $0x50] sm:$0xff]
    %v506 = vld [vmem:[#allocation7 + $0x58] sm:$0xff]
    %v507 = vld [vmem:[#allocation7 + $0x60] sm:$0xff]
    %v508 = vld [vmem:[#allocation7 + $0x68] sm:$0xff]
    %v509 = vld [vmem:[#allocation7 + $0x70] sm:$0xff]
    %v510 = vld [vmem:[#allocation7 + $0x78] sm:$0xff]
    %v511 = vld [vmem:[#allocation7 + $0x80] sm:$0xff]
    %v512 = vld [vmem:[#allocation7 + $0x88] sm:$0xff]
    %v513 = vld [vmem:[#allocation7 + $0x90] sm:$0xff]
    %v514 = vld [vmem:[#allocation7 + $0x98] sm:$0xff]
    %v515 = vld [vmem:[#allocation7 + $0xa0] sm:$0xff]
    %v516 = vld [vmem:[#allocation7 + $0xa8] sm:$0xff]
    %v517 = vld [vmem:[#allocation7 + $0xb0] sm:$0xff]
    %v518 = vld [vmem:[#allocation7 + $0xb8] sm:$0xff]
    %v519 = vld [vmem:[#allocation7 + $0xc0] sm:$0xff]
    %v520 = vld [vmem:[#allocation7 + $0xc8] sm:$0xff]
    %v521 = vld [vmem:[#allocation7 + $0xd0] sm:$0xff]
    %v522 = vld [vmem:[#allocation7 + $0xd8] sm:$0xff]
    %v523 = vld [vmem:[#allocation7 + $0xe0] sm:$0xff]
    %v524 = vld [vmem:[#allocation7 + $0xe8] sm:$0xff]
    %v525 = vld [vmem:[#allocation7 + $0xf0] sm:$0xff]
    %v526 = vld [vmem:[#allocation7 + $0xf8] sm:$0xff]
    %v527 = vld [vmem:[#allocation7 + $0x100] sm:$0xff]
    %v528 = vld [vmem:[#allocation7 + $0x108] sm:$0xff]
    %v529 = vld [vmem:[#allocation7 + $0x110] sm:$0xff]
    %v530 = vld [vmem:[#allocation7 + $0x118] sm:$0xff]
    %v531 = vld [vmem:[#allocation7 + $0x120] sm:$0xff]
    %v532 = vld [vmem:[#allocation7 + $0x128] sm:$0xff]
    %v533 = vld [vmem:[#allocation7 + $0x130] sm:$0xff]
    %v534 = vld [vmem:[#allocation7 + $0x138] sm:$0xff]
    %v535 = vld [vmem:[#allocation7 + $0x140] sm:$0xff]
    %v536 = vld [vmem:[#allocation7 + $0x148] sm:$0xff]
    %v537 = vld [vmem:[#allocation7 + $0x150] sm:$0xff]
    %v538 = vld [vmem:[#allocation7 + $0x158] sm:$0xff]
    %v539 = vld [vmem:[#allocation7 + $0x160] sm:$0xff]
    %v540 = vld [vmem:[#allocation7 + $0x168] sm:$0xff]
    %v541 = vld [vmem:[#allocation7 + $0x170] sm:$0xff]
    %v542 = vld [vmem:[#allocation7 + $0x178] sm:$0xff]
    %v543 = vld [vmem:[#allocation7 + $0x180] sm:$0xff]
    %v544 = vld [vmem:[#allocation7 + $0x188] sm:$0xff]
    %v545 = vld [vmem:[#allocation7 + $0x190] sm:$0xff]
    %v546 = vld [vmem:[#allocation7 + $0x198] sm:$0xff]
    %v547 = vld [vmem:[#allocation7 + $0x1a0] sm:$0xff]
    %v548 = vld [vmem:[#allocation7 + $0x1a8] sm:$0xff]
    %v549 = vld [vmem:[#allocation7 + $0x1b0] sm:$0xff]
    %v550 = vld [vmem:[#allocation7 + $0x1b8] sm:$0xff]
    %v551 = vld [vmem:[#allocation7 + $0x1c0] sm:$0xff]
    %v552 = vld [vmem:[#allocation7 + $0x1c8] sm:$0xff]
    %v553 = vld [vmem:[#allocation7 + $0x1d0] sm:$0xff]
    %v554 = vld [vmem:[#allocation7 + $0x1d8] sm:$0xff]
    %v555 = vld [vmem:[#allocation7 + $0x1e0] sm:$0xff]
    %v556 = vld [vmem:[#allocation7 + $0x1e8] sm:$0xff]
    %v557 = vld [vmem:[#allocation7 + $0x1f0] sm:$0xff]
    %v558 = vld [vmem:[#allocation7 + $0x1f8] sm:$0xff]
    %559 = vmatpush.msra.mxu0 %v555
    %560 = vmatpush.msra.mxu0 %v551
    %561 = vmatpush.msra.mxu0 %v547
    %562 = vmatpush.msra.mxu0 %v543
    %563 = vmatpush.msra.mxu0 %v539
    %564 = vmatpush.msra.mxu0 %v535
    %565 = vmatpush.msra.mxu0 %v531
    %566 = vmatpush.msra.mxu0 %v527
    %567 = vmatpush.msra.mxu0 %v523
    %568 = vmatpush.msra.mxu0 %v519
    %569 = vmatpush.msra.mxu0 %v515
    %570 = vmatpush.msra.mxu0 %v511
    %571 = vmatpush.msra.mxu0 %v507
    %572 = vmatpush.msra.mxu0 %v503
    %573 = vmatpush.msra.mxu0 %v499
    %574 = vmatpush.msra.mxu0 %v495
    %575 = vmatmul.f32.gmra.mxu0 %v487
    %v576 = vpop.f32.mrf.mxu0
    %v577 = vadd.f32 0.0, %v576
    %578 = vdwg.mxu0
    %579 = vmatpush.msra.mxu0 %v556
    %580 = vmatpush.msra.mxu0 %v552
    %581 = vmatpush.msra.mxu0 %v548
    %582 = vmatpush.msra.mxu0 %v544
    %583 = vmatpush.msra.mxu0 %v540
    %584 = vmatpush.msra.mxu0 %v536
    %585 = vmatpush.msra.mxu0 %v532
    %586 = vmatpush.msra.mxu0 %v528
    %587 = vmatpush.msra.mxu0 %v524
    %588 = vmatpush.msra.mxu0 %v520
    %589 = vmatpush.msra.mxu0 %v516
    %590 = vmatpush.msra.mxu0 %v512
    %591 = vmatpush.msra.mxu0 %v508
    %592 = vmatpush.msra.mxu0 %v504
    %593 = vmatpush.msra.mxu0 %v500
    %594 = vmatpush.msra.mxu0 %v496
    %595 = vmatmul.f32.gmra.mxu0 %v487
    %v596 = vpop.f32.mrf.mxu0
    %v597 = vadd.f32 0.0, %v596
    %598 = vdwg.mxu0
    %599 = vmatpush.msra.mxu0 %v557
    %600 = vmatpush.msra.mxu0 %v553
    %601 = vmatpush.msra.mxu0 %v549
    %602 = vmatpush.msra.mxu0 %v545
    %603 = vmatpush.msra.mxu0 %v541
    %604 = vmatpush.msra.mxu0 %v537
    %605 = vmatpush.msra.mxu0 %v533
    %606 = vmatpush.msra.mxu0 %v529
    %607 = vmatpush.msra.mxu0 %v525
    %608 = vmatpush.msra.mxu0 %v521
    %609 = vmatpush.msra.mxu0 %v517
    %610 = vmatpush.msra.mxu0 %v513
    %611 = vmatpush.msra.mxu0 %v509
    %612 = vmatpush.msra.mxu0 %v505
    %613 = vmatpush.msra.mxu0 %v501
    %614 = vmatpush.msra.mxu0 %v497
    %615 = vmatmul.f32.gmra.mxu0 %v487
    %v616 = vpop.f32.mrf.mxu0
    %v617 = vadd.f32 0.0, %v616
    %618 = vdwg.mxu0
    %619 = vmatpush.msra.mxu0 %v558
    %620 = vmatpush.msra.mxu0 %v554
    %621 = vmatpush.msra.mxu0 %v550
    %622 = vmatpush.msra.mxu0 %v546
    %623 = vmatpush.msra.mxu0 %v542
    %624 = vmatpush.msra.mxu0 %v538
    %625 = vmatpush.msra.mxu0 %v534
    %626 = vmatpush.msra.mxu0 %v530
    %627 = vmatpush.msra.mxu0 %v526
    %628 = vmatpush.msra.mxu0 %v522
    %629 = vmatpush.msra.mxu0 %v518
    %630 = vmatpush.msra.mxu0 %v514
    %631 = vmatpush.msra.mxu0 %v510
    %632 = vmatpush.msra.mxu0 %v506
    %633 = vmatpush.msra.mxu0 %v502
    %634 = vmatpush.msra.mxu0 %v498
    %635 = vmatmul.f32.gmra.mxu0 %v487
    %v636 = vpop.f32.mrf.mxu0
    %v637 = vadd.f32 0.0, %v636
    %638 = vdwg.mxu0
    %v639 = vadd.f32 %v491, %v577
    %v640 = vadd.f32 %v492, %v597
    %v641 = vadd.f32 %v493, %v617
    %v642 = vadd.f32 %v494, %v637
    %v643 = vxor.u32 %v639, 2147483648
    %v644 = vmul.f32 %v643, 1.442695
    %v645 = vpow.pop %v644
    %v646 = vadd.f32 %v645, 1.0
    %v647 = vrcp.pop %v646
    %v648 = vmul.f32 %v646, %v647
    %v649 = vsub.f32 1.0, %v648
    %v650 = vmul.f32 %v647, %v649
    %v651 = vadd.f32 %v647, %v650
    %vm652 = vweird.f32 %v646
    %vm653 = vweird.f32 %v647
    %vm654 = vmor %vm652, %vm653
    %v655 = vsel %vm654, %v647, %v651
    %v656 = vand.u32 2147483647, %v646
    %vm657 = vcmp.eq.f32.partialorder %v656, 8.507059e+37
    %v658 = vand.u32 %v646, 2147483648
    %v659 = vor.u32 1.1754944e-38, %v658
    %v660 = vsel %vm657, %v659, %v655
    %v661 = vmul.f32 1.0, %v660
    %v662 = vxor.u32 %v640, 2147483648
    %v663 = vmul.f32 %v662, 1.442695
    %v664 = vpow.pop %v663
    %v665 = vadd.f32 %v664, 1.0
    %v666 = vrcp.pop %v665
    %v667 = vmul.f32 %v665, %v666
    %v668 = vsub.f32 1.0, %v667
    %v669 = vmul.f32 %v666, %v668
    %v670 = vadd.f32 %v666, %v669
    %vm671 = vweird.f32 %v665
    %vm672 = vweird.f32 %v666
    %vm673 = vmor %vm671, %vm672
    %v674 = vsel %vm673, %v666, %v670
    %v675 = vand.u32 2147483647, %v665
    %vm676 = vcmp.eq.f32.partialorder %v675, 8.507059e+37
    %v677 = vand.u32 %v665, 2147483648
    %v678 = vor.u32 1.1754944e-38, %v677
    %v679 = vsel %vm676, %v678, %v674
    %v680 = vmul.f32 1.0, %v679
    %v681 = vtanh.pop %v641
    %v682 = vxor.u32 %v642, 2147483648
    %v683 = vmul.f32 %v682, 1.442695
    %v684 = vpow.pop %v683
    %v685 = vadd.f32 %v684, 1.0
    %v686 = vrcp.pop %v685
    %v687 = vmul.f32 %v685, %v686
    %v688 = vsub.f32 1.0, %v687
    %v689 = vmul.f32 %v686, %v688
    %v690 = vadd.f32 %v686, %v689
    %vm691 = vweird.f32 %v685
    %vm692 = vweird.f32 %v686
    %vm693 = vmor %vm691, %vm692
    %v694 = vsel %vm693, %v686, %v690
    %v695 = vand.u32 2147483647, %v685
    %vm696 = vcmp.eq.f32.partialorder %v695, 8.507059e+37
    %v697 = vand.u32 %v685, 2147483648
    %v698 = vor.u32 1.1754944e-38, %v697
    %v699 = vsel %vm696, %v698, %v694
    %v700 = vmul.f32 1.0, %v699
    %v701 = vmul.f32 %v680, %v485
    %v702 = vmul.f32 %v661, %v681
    %v703 = vadd.f32 %v701, %v702
    %v704 = vtanh.pop %v703
    %v705 = vmul.f32 %v700, %v704
    %s706 = scalar_lea.vmem [#allocation9], 16
    %707 = vst [vmem:[%s706] sm:$0xff] %v705
    %s708 = scalar_lea.vmem [#allocation4], 96
    %v709 = vld [vmem:[%s708] sm:$0xff]
    %v710 = vld [vmem:[%s708 + $0x8] sm:$0xff]
    %v711 = vld [vmem:[%s708 + $0x10] sm:$0xff]
    %v712 = vld [vmem:[%s708 + $0x18] sm:$0xff]
    %v713 = vld [vmem:[#allocation7] sm:$0xff]
    %v714 = vld [vmem:[#allocation7 + $0x8] sm:$0xff]
    %v715 = vld [vmem:[#allocation7 + $0x10] sm:$0xff]
    %v716 = vld [vmem:[#allocation7 + $0x18] sm:$0xff]
    %v717 = vld [vmem:[#allocation7 + $0x20] sm:$0xff]
    %v718 = vld [vmem:[#allocation7 + $0x28] sm:$0xff]
    %v719 = vld [vmem:[#allocation7 + $0x30] sm:$0xff]
    %v720 = vld [vmem:[#allocation7 + $0x38] sm:$0xff]
    %v721 = vld [vmem:[#allocation7 + $0x40] sm:$0xff]
    %v722 = vld [vmem:[#allocation7 + $0x48] sm:$0xff]
    %v723 = vld [vmem:[#allocation7 + $0x50] sm:$0xff]
    %v724 = vld [vmem:[#allocation7 + $0x58] sm:$0xff]
    %v725 = vld [vmem:[#allocation7 + $0x60] sm:$0xff]
    %v726 = vld [vmem:[#allocation7 + $0x68] sm:$0xff]
    %v727 = vld [vmem:[#allocation7 + $0x70] sm:$0xff]
    %v728 = vld [vmem:[#allocation7 + $0x78] sm:$0xff]
    %v729 = vld [vmem:[#allocation7 + $0x80] sm:$0xff]
    %v730 = vld [vmem:[#allocation7 + $0x88] sm:$0xff]
    %v731 = vld [vmem:[#allocation7 + $0x90] sm:$0xff]
    %v732 = vld [vmem:[#allocation7 + $0x98] sm:$0xff]
    %v733 = vld [vmem:[#allocation7 + $0xa0] sm:$0xff]
    %v734 = vld [vmem:[#allocation7 + $0xa8] sm:$0xff]
    %v735 = vld [vmem:[#allocation7 + $0xb0] sm:$0xff]
    %v736 = vld [vmem:[#allocation7 + $0xb8] sm:$0xff]
    %v737 = vld [vmem:[#allocation7 + $0xc0] sm:$0xff]
    %v738 = vld [vmem:[#allocation7 + $0xc8] sm:$0xff]
    %v739 = vld [vmem:[#allocation7 + $0xd0] sm:$0xff]
    %v740 = vld [vmem:[#allocation7 + $0xd8] sm:$0xff]
    %v741 = vld [vmem:[#allocation7 + $0xe0] sm:$0xff]
    %v742 = vld [vmem:[#allocation7 + $0xe8] sm:$0xff]
    %v743 = vld [vmem:[#allocation7 + $0xf0] sm:$0xff]
    %v744 = vld [vmem:[#allocation7 + $0xf8] sm:$0xff]
    %v745 = vld [vmem:[#allocation7 + $0x100] sm:$0xff]
    %v746 = vld [vmem:[#allocation7 + $0x108] sm:$0xff]
    %v747 = vld [vmem:[#allocation7 + $0x110] sm:$0xff]
    %v748 = vld [vmem:[#allocation7 + $0x118] sm:$0xff]
    %v749 = vld [vmem:[#allocation7 + $0x120] sm:$0xff]
    %v750 = vld [vmem:[#allocation7 + $0x128] sm:$0xff]
    %v751 = vld [vmem:[#allocation7 + $0x130] sm:$0xff]
    %v752 = vld [vmem:[#allocation7 + $0x138] sm:$0xff]
    %v753 = vld [vmem:[#allocation7 + $0x140] sm:$0xff]
    %v754 = vld [vmem:[#allocation7 + $0x148] sm:$0xff]
    %v755 = vld [vmem:[#allocation7 + $0x150] sm:$0xff]
    %v756 = vld [vmem:[#allocation7 + $0x158] sm:$0xff]
    %v757 = vld [vmem:[#allocation7 + $0x160] sm:$0xff]
    %v758 = vld [vmem:[#allocation7 + $0x168] sm:$0xff]
    %v759 = vld [vmem:[#allocation7 + $0x170] sm:$0xff]
    %v760 = vld [vmem:[#allocation7 + $0x178] sm:$0xff]
    %v761 = vld [vmem:[#allocation7 + $0x180] sm:$0xff]
    %v762 = vld [vmem:[#allocation7 + $0x188] sm:$0xff]
    %v763 = vld [vmem:[#allocation7 + $0x190] sm:$0xff]
    %v764 = vld [vmem:[#allocation7 + $0x198] sm:$0xff]
    %v765 = vld [vmem:[#allocation7 + $0x1a0] sm:$0xff]
    %v766 = vld [vmem:[#allocation7 + $0x1a8] sm:$0xff]
    %v767 = vld [vmem:[#allocation7 + $0x1b0] sm:$0xff]
    %v768 = vld [vmem:[#allocation7 + $0x1b8] sm:$0xff]
    %v769 = vld [vmem:[#allocation7 + $0x1c0] sm:$0xff]
    %v770 = vld [vmem:[#allocation7 + $0x1c8] sm:$0xff]
    %v771 = vld [vmem:[#allocation7 + $0x1d0] sm:$0xff]
    %v772 = vld [vmem:[#allocation7 + $0x1d8] sm:$0xff]
    %v773 = vld [vmem:[#allocation7 + $0x1e0] sm:$0xff]
    %v774 = vld [vmem:[#allocation7 + $0x1e8] sm:$0xff]
    %v775 = vld [vmem:[#allocation7 + $0x1f0] sm:$0xff]
    %v776 = vld [vmem:[#allocation7 + $0x1f8] sm:$0xff]
    %777 = vmatpush.msra.mxu0 %v773
    %778 = vmatpush.msra.mxu0 %v769
    %779 = vmatpush.msra.mxu0 %v765
    %780 = vmatpush.msra.mxu0 %v761
    %781 = vmatpush.msra.mxu0 %v757
    %782 = vmatpush.msra.mxu0 %v753
    %783 = vmatpush.msra.mxu0 %v749
    %784 = vmatpush.msra.mxu0 %v745
    %785 = vmatpush.msra.mxu0 %v741
    %786 = vmatpush.msra.mxu0 %v737
    %787 = vmatpush.msra.mxu0 %v733
    %788 = vmatpush.msra.mxu0 %v729
    %789 = vmatpush.msra.mxu0 %v725
    %790 = vmatpush.msra.mxu0 %v721
    %791 = vmatpush.msra.mxu0 %v717
    %792 = vmatpush.msra.mxu0 %v713
    %793 = vmatmul.f32.gmra.mxu0 %v705
    %v794 = vpop.f32.mrf.mxu0
    %v795 = vadd.f32 0.0, %v794
    %796 = vdwg.mxu0
    %797 = vmatpush.msra.mxu0 %v774
    %798 = vmatpush.msra.mxu0 %v770
    %799 = vmatpush.msra.mxu0 %v766
    %800 = vmatpush.msra.mxu0 %v762
    %801 = vmatpush.msra.mxu0 %v758
    %802 = vmatpush.msra.mxu0 %v754
    %803 = vmatpush.msra.mxu0 %v750
    %804 = vmatpush.msra.mxu0 %v746
    %805 = vmatpush.msra.mxu0 %v742
    %806 = vmatpush.msra.mxu0 %v738
    %807 = vmatpush.msra.mxu0 %v734
    %808 = vmatpush.msra.mxu0 %v730
    %809 = vmatpush.msra.mxu0 %v726
    %810 = vmatpush.msra.mxu0 %v722
    %811 = vmatpush.msra.mxu0 %v718
    %812 = vmatpush.msra.mxu0 %v714
    %813 = vmatmul.f32.gmra.mxu0 %v705
    %v814 = vpop.f32.mrf.mxu0
    %v815 = vadd.f32 0.0, %v814
    %816 = vdwg.mxu0
    %817 = vmatpush.msra.mxu0 %v775
    %818 = vmatpush.msra.mxu0 %v771
    %819 = vmatpush.msra.mxu0 %v767
    %820 = vmatpush.msra.mxu0 %v763
    %821 = vmatpush.msra.mxu0 %v759
    %822 = vmatpush.msra.mxu0 %v755
    %823 = vmatpush.msra.mxu0 %v751
    %824 = vmatpush.msra.mxu0 %v747
    %825 = vmatpush.msra.mxu0 %v743
    %826 = vmatpush.msra.mxu0 %v739
    %827 = vmatpush.msra.mxu0 %v735
    %828 = vmatpush.msra.mxu0 %v731
    %829 = vmatpush.msra.mxu0 %v727
    %830 = vmatpush.msra.mxu0 %v723
    %831 = vmatpush.msra.mxu0 %v719
    %832 = vmatpush.msra.mxu0 %v715
    %833 = vmatmul.f32.gmra.mxu0 %v705
    %v834 = vpop.f32.mrf.mxu0
    %v835 = vadd.f32 0.0, %v834
    %836 = vdwg.mxu0
    %837 = vmatpush.msra.mxu0 %v776
    %838 = vmatpush.msra.mxu0 %v772
    %839 = vmatpush.msra.mxu0 %v768
    %840 = vmatpush.msra.mxu0 %v764
    %841 = vmatpush.msra.mxu0 %v760
    %842 = vmatpush.msra.mxu0 %v756
    %843 = vmatpush.msra.mxu0 %v752
    %844 = vmatpush.msra.mxu0 %v748
    %845 = vmatpush.msra.mxu0 %v744
    %846 = vmatpush.msra.mxu0 %v740
    %847 = vmatpush.msra.mxu0 %v736
    %848 = vmatpush.msra.mxu0 %v732
    %849 = vmatpush.msra.mxu0 %v728
    %850 = vmatpush.msra.mxu0 %v724
    %851 = vmatpush.msra.mxu0 %v720
    %852 = vmatpush.msra.mxu0 %v716
    %853 = vmatmul.f32.gmra.mxu0 %v705
    %v854 = vpop.f32.mrf.mxu0
    %v855 = vadd.f32 0.0, %v854
    %856 = vdwg.mxu0
    %v857 = vadd.f32 %v709, %v795
    %v858 = vadd.f32 %v710, %v815
    %v859 = vadd.f32 %v711, %v835
    %v860 = vadd.f32 %v712, %v855
    %v861 = vxor.u32 %v857, 2147483648
    %v862 = vmul.f32 %v861, 1.442695
    %v863 = vpow.pop %v862
    %v864 = vadd.f32 %v863, 1.0
    %v865 = vrcp.pop %v864
    %v866 = vmul.f32 %v864, %v865
    %v867 = vsub.f32 1.0, %v866
    %v868 = vmul.f32 %v865, %v867
    %v869 = vadd.f32 %v865, %v868
    %vm870 = vweird.f32 %v864
    %vm871 = vweird.f32 %v865
    %vm872 = vmor %vm870, %vm871
    %v873 = vsel %vm872, %v865, %v869
    %v874 = vand.u32 2147483647, %v864
    %vm875 = vcmp.eq.f32.partialorder %v874, 8.507059e+37
    %v876 = vand.u32 %v864, 2147483648
    %v877 = vor.u32 1.1754944e-38, %v876
    %v878 = vsel %vm875, %v877, %v873
    %v879 = vmul.f32 1.0, %v878
    %v880 = vxor.u32 %v858, 2147483648
    %v881 = vmul.f32 %v880, 1.442695
    %v882 = vpow.pop %v881
    %v883 = vadd.f32 %v882, 1.0
    %v884 = vrcp.pop %v883
    %v885 = vmul.f32 %v883, %v884
    %v886 = vsub.f32 1.0, %v885
    %v887 = vmul.f32 %v884, %v886
    %v888 = vadd.f32 %v884, %v887
    %vm889 = vweird.f32 %v883
    %vm890 = vweird.f32 %v884
    %vm891 = vmor %vm889, %vm890
    %v892 = vsel %vm891, %v884, %v888
    %v893 = vand.u32 2147483647, %v883
    %vm894 = vcmp.eq.f32.partialorder %v893, 8.507059e+37
    %v895 = vand.u32 %v883, 2147483648
    %v896 = vor.u32 1.1754944e-38, %v895
    %v897 = vsel %vm894, %v896, %v892
    %v898 = vmul.f32 1.0, %v897
    %v899 = vtanh.pop %v859
    %v900 = vxor.u32 %v860, 2147483648
    %v901 = vmul.f32 %v900, 1.442695
    %v902 = vpow.pop %v901
    %v903 = vadd.f32 %v902, 1.0
    %v904 = vrcp.pop %v903
    %v905 = vmul.f32 %v903, %v904
    %v906 = vsub.f32 1.0, %v905
    %v907 = vmul.f32 %v904, %v906
    %v908 = vadd.f32 %v904, %v907
    %vm909 = vweird.f32 %v903
    %vm910 = vweird.f32 %v904
    %vm911 = vmor %vm909, %vm910
    %v912 = vsel %vm911, %v904, %v908
    %v913 = vand.u32 2147483647, %v903
    %vm914 = vcmp.eq.f32.partialorder %v913, 8.507059e+37
    %v915 = vand.u32 %v903, 2147483648
    %v916 = vor.u32 1.1754944e-38, %v915
    %v917 = vsel %vm914, %v916, %v912
    %v918 = vmul.f32 1.0, %v917
    %v919 = vmul.f32 %v898, %v703
    %v920 = vmul.f32 %v879, %v899
    %v921 = vadd.f32 %v919, %v920
    %v922 = vtanh.pop %v921
    %v923 = vmul.f32 %v918, %v922
    %s924 = scalar_lea.vmem [#allocation9], 24
    %925 = vst [vmem:[%s924] sm:$0xff] %v923
    %s926 = scalar_lea.vmem [#allocation4], 128
    %v927 = vld [vmem:[%s926] sm:$0xff]
    %v928 = vld [vmem:[%s926 + $0x8] sm:$0xff]
    %v929 = vld [vmem:[%s926 + $0x10] sm:$0xff]
    %v930 = vld [vmem:[%s926 + $0x18] sm:$0xff]
    %v931 = vld [vmem:[#allocation7] sm:$0xff]
    %v932 = vld [vmem:[#allocation7 + $0x8] sm:$0xff]
    %v933 = vld [vmem:[#allocation7 + $0x10] sm:$0xff]
    %v934 = vld [vmem:[#allocation7 + $0x18] sm:$0xff]
    %v935 = vld [vmem:[#allocation7 + $0x20] sm:$0xff]
    %v936 = vld [vmem:[#allocation7 + $0x28] sm:$0xff]
    %v937 = vld [vmem:[#allocation7 + $0x30] sm:$0xff]
    %v938 = vld [vmem:[#allocation7 + $0x38] sm:$0xff]
    %v939 = vld [vmem:[#allocation7 + $0x40] sm:$0xff]
    %v940 = vld [vmem:[#allocation7 + $0x48] sm:$0xff]
    %v941 = vld [vmem:[#allocation7 + $0x50] sm:$0xff]
    %v942 = vld [vmem:[#allocation7 + $0x58] sm:$0xff]
    %v943 = vld [vmem:[#allocation7 + $0x60] sm:$0xff]
    %v944 = vld [vmem:[#allocation7 + $0x68] sm:$0xff]
    %v945 = vld [vmem:[#allocation7 + $0x70] sm:$0xff]
    %v946 = vld [vmem:[#allocation7 + $0x78] sm:$0xff]
    %v947 = vld [vmem:[#allocation7 + $0x80] sm:$0xff]
    %v948 = vld [vmem:[#allocation7 + $0x88] sm:$0xff]
    %v949 = vld [vmem:[#allocation7 + $0x90] sm:$0xff]
    %v950 = vld [vmem:[#allocation7 + $0x98] sm:$0xff]
    %v951 = vld [vmem:[#allocation7 + $0xa0] sm:$0xff]
    %v952 = vld [vmem:[#allocation7 + $0xa8] sm:$0xff]
    %v953 = vld [vmem:[#allocation7 + $0xb0] sm:$0xff]
    %v954 = vld [vmem:[#allocation7 + $0xb8] sm:$0xff]
    %v955 = vld [vmem:[#allocation7 + $0xc0] sm:$0xff]
    %v956 = vld [vmem:[#allocation7 + $0xc8] sm:$0xff]
    %v957 = vld [vmem:[#allocation7 + $0xd0] sm:$0xff]
    %v958 = vld [vmem:[#allocation7 + $0xd8] sm:$0xff]
    %v959 = vld [vmem:[#allocation7 + $0xe0] sm:$0xff]
    %v960 = vld [vmem:[#allocation7 + $0xe8] sm:$0xff]
    %v961 = vld [vmem:[#allocation7 + $0xf0] sm:$0xff]
    %v962 = vld [vmem:[#allocation7 + $0xf8] sm:$0xff]
    %v963 = vld [vmem:[#allocation7 + $0x100] sm:$0xff]
    %v964 = vld [vmem:[#allocation7 + $0x108] sm:$0xff]
    %v965 = vld [vmem:[#allocation7 + $0x110] sm:$0xff]
    %v966 = vld [vmem:[#allocation7 + $0x118] sm:$0xff]
    %v967 = vld [vmem:[#allocation7 + $0x120] sm:$0xff]
    %v968 = vld [vmem:[#allocation7 + $0x128] sm:$0xff]
    %v969 = vld [vmem:[#allocation7 + $0x130] sm:$0xff]
    %v970 = vld [vmem:[#allocation7 + $0x138] sm:$0xff]
    %v971 = vld [vmem:[#allocation7 + $0x140] sm:$0xff]
    %v972 = vld [vmem:[#allocation7 + $0x148] sm:$0xff]
    %v973 = vld [vmem:[#allocation7 + $0x150] sm:$0xff]
    %v974 = vld [vmem:[#allocation7 + $0x158] sm:$0xff]
    %v975 = vld [vmem:[#allocation7 + $0x160] sm:$0xff]
    %v976 = vld [vmem:[#allocation7 + $0x168] sm:$0xff]
    %v977 = vld [vmem:[#allocation7 + $0x170] sm:$0xff]
    %v978 = vld [vmem:[#allocation7 + $0x178] sm:$0xff]
    %v979 = vld [vmem:[#allocation7 + $0x180] sm:$0xff]
    %v980 = vld [vmem:[#allocation7 + $0x188] sm:$0xff]
    %v981 = vld [vmem:[#allocation7 + $0x190] sm:$0xff]
    %v982 = vld [vmem:[#allocation7 + $0x198] sm:$0xff]
    %v983 = vld [vmem:[#allocation7 + $0x1a0] sm:$0xff]
    %v984 = vld [vmem:[#allocation7 + $0x1a8] sm:$0xff]
    %v985 = vld [vmem:[#allocation7 + $0x1b0] sm:$0xff]
    %v986 = vld [vmem:[#allocation7 + $0x1b8] sm:$0xff]
    %v987 = vld [vmem:[#allocation7 + $0x1c0] sm:$0xff]
    %v988 = vld [vmem:[#allocation7 + $0x1c8] sm:$0xff]
    %v989 = vld [vmem:[#allocation7 + $0x1d0] sm:$0xff]
    %v990 = vld [vmem:[#allocation7 + $0x1d8] sm:$0xff]
    %v991 = vld [vmem:[#allocation7 + $0x1e0] sm:$0xff]
    %v992 = vld [vmem:[#allocation7 + $0x1e8] sm:$0xff]
    %v993 = vld [vmem:[#allocation7 + $0x1f0] sm:$0xff]
    %v994 = vld [vmem:[#allocation7 + $0x1f8] sm:$0xff]
    %995 = vmatpush.msra.mxu0 %v991
    %996 = vmatpush.msra.mxu0 %v987
    %997 = vmatpush.msra.mxu0 %v983
    %998 = vmatpush.msra.mxu0 %v979
    %999 = vmatpush.msra.mxu0 %v975
    %1000 = vmatpush.msra.mxu0 %v971
    %1001 = vmatpush.msra.mxu0 %v967
    %1002 = vmatpush.msra.mxu0 %v963
    %1003 = vmatpush.msra.mxu0 %v959
    %1004 = vmatpush.msra.mxu0 %v955
    %1005 = vmatpush.msra.mxu0 %v951
    %1006 = vmatpush.msra.mxu0 %v947
    %1007 = vmatpush.msra.mxu0 %v943
    %1008 = vmatpush.msra.mxu0 %v939
    %1009 = vmatpush.msra.mxu0 %v935
    %1010 = vmatpush.msra.mxu0 %v931
    %1011 = vmatmul.f32.gmra.mxu0 %v923
    %v1012 = vpop.f32.mrf.mxu0
    %v1013 = vadd.f32 0.0, %v1012
    %1014 = vdwg.mxu0
    %1015 = vmatpush.msra.mxu0 %v992
    %1016 = vmatpush.msra.mxu0 %v988
    %1017 = vmatpush.msra.mxu0 %v984
    %1018 = vmatpush.msra.mxu0 %v980
    %1019 = vmatpush.msra.mxu0 %v976
    %1020 = vmatpush.msra.mxu0 %v972
    %1021 = vmatpush.msra.mxu0 %v968
    %1022 = vmatpush.msra.mxu0 %v964
    %1023 = vmatpush.msra.mxu0 %v960
    %1024 = vmatpush.msra.mxu0 %v956
    %1025 = vmatpush.msra.mxu0 %v952
    %1026 = vmatpush.msra.mxu0 %v948
    %1027 = vmatpush.msra.mxu0 %v944
    %1028 = vmatpush.msra.mxu0 %v940
    %1029 = vmatpush.msra.mxu0 %v936
    %1030 = vmatpush.msra.mxu0 %v932
    %1031 = vmatmul.f32.gmra.mxu0 %v923
    %v1032 = vpop.f32.mrf.mxu0
    %v1033 = vadd.f32 0.0, %v1032
    %1034 = vdwg.mxu0
    %1035 = vmatpush.msra.mxu0 %v993
    %1036 = vmatpush.msra.mxu0 %v989
    %1037 = vmatpush.msra.mxu0 %v985
    %1038 = vmatpush.msra.mxu0 %v981
    %1039 = vmatpush.msra.mxu0 %v977
    %1040 = vmatpush.msra.mxu0 %v973
    %1041 = vmatpush.msra.mxu0 %v969
    %1042 = vmatpush.msra.mxu0 %v965
    %1043 = vmatpush.msra.mxu0 %v961
    %1044 = vmatpush.msra.mxu0 %v957
    %1045 = vmatpush.msra.mxu0 %v953
    %1046 = vmatpush.msra.mxu0 %v949
    %1047 = vmatpush.msra.mxu0 %v945
    %1048 = vmatpush.msra.mxu0 %v941
    %1049 = vmatpush.msra.mxu0 %v937
    %1050 = vmatpush.msra.mxu0 %v933
    %1051 = vmatmul.f32.gmra.mxu0 %v923
    %v1052 = vpop.f32.mrf.mxu0
    %v1053 = vadd.f32 0.0, %v1052
    %1054 = vdwg.mxu0
    %1055 = vmatpush.msra.mxu0 %v994
    %1056 = vmatpush.msra.mxu0 %v990
    %1057 = vmatpush.msra.mxu0 %v986
    %1058 = vmatpush.msra.mxu0 %v982
    %1059 = vmatpush.msra.mxu0 %v978
    %1060 = vmatpush.msra.mxu0 %v974
    %1061 = vmatpush.msra.mxu0 %v970
    %1062 = vmatpush.msra.mxu0 %v966
    %1063 = vmatpush.msra.mxu0 %v962
    %1064 = vmatpush.msra.mxu0 %v958
    %1065 = vmatpush.msra.mxu0 %v954
    %1066 = vmatpush.msra.mxu0 %v950
    %1067 = vmatpush.msra.mxu0 %v946
    %1068 = vmatpush.msra.mxu0 %v942
    %1069 = vmatpush.msra.mxu0 %v938
    %1070 = vmatpush.msra.mxu0 %v934
    %1071 = vmatmul.f32.gmra.mxu0 %v923
    %v1072 = vpop.f32.mrf.mxu0
    %v1073 = vadd.f32 0.0, %v1072
    %1074 = vdwg.mxu0
    %v1075 = vadd.f32 %v927, %v1013
    %v1076 = vadd.f32 %v928, %v1033
    %v1077 = vadd.f32 %v929, %v1053
    %v1078 = vadd.f32 %v930, %v1073
    %v1079 = vxor.u32 %v1075, 2147483648
    %v1080 = vmul.f32 %v1079, 1.442695
    %v1081 = vpow.pop %v1080
    %v1082 = vadd.f32 %v1081, 1.0
    %v1083 = vrcp.pop %v1082
    %v1084 = vmul.f32 %v1082, %v1083
    %v1085 = vsub.f32 1.0, %v1084
    %v1086 = vmul.f32 %v1083, %v1085
    %v1087 = vadd.f32 %v1083, %v1086
    %vm1088 = vweird.f32 %v1082
    %vm1089 = vweird.f32 %v1083
    %vm1090 = vmor %vm1088, %vm1089
    %v1091 = vsel %vm1090, %v1083, %v1087
    %v1092 = vand.u32 2147483647, %v1082
    %vm1093 = vcmp.eq.f32.partialorder %v1092, 8.507059e+37
    %v1094 = vand.u32 %v1082, 2147483648
    %v1095 = vor.u32 1.1754944e-38, %v1094
    %v1096 = vsel %vm1093, %v1095, %v1091
    %v1097 = vmul.f32 1.0, %v1096
    %v1098 = vxor.u32 %v1076, 2147483648
    %v1099 = vmul.f32 %v1098, 1.442695
    %v1100 = vpow.pop %v1099
    %v1101 = vadd.f32 %v1100, 1.0
    %v1102 = vrcp.pop %v1101
    %v1103 = vmul.f32 %v1101, %v1102
    %v1104 = vsub.f32 1.0, %v1103
    %v1105 = vmul.f32 %v1102, %v1104
    %v1106 = vadd.f32 %v1102, %v1105
    %vm1107 = vweird.f32 %v1101
    %vm1108 = vweird.f32 %v1102
    %vm1109 = vmor %vm1107, %vm1108
    %v1110 = vsel %vm1109, %v1102, %v1106
    %v1111 = vand.u32 2147483647, %v1101
    %vm1112 = vcmp.eq.f32.partialorder %v1111, 8.507059e+37
    %v1113 = vand.u32 %v1101, 2147483648
    %v1114 = vor.u32 1.1754944e-38, %v1113
    %v1115 = vsel %vm1112, %v1114, %v1110
    %v1116 = vmul.f32 1.0, %v1115
    %v1117 = vtanh.pop %v1077
    %v1118 = vxor.u32 %v1078, 2147483648
    %v1119 = vmul.f32 %v1118, 1.442695
    %v1120 = vpow.pop %v1119
    %v1121 = vadd.f32 %v1120, 1.0
    %v1122 = vrcp.pop %v1121
    %v1123 = vmul.f32 %v1121, %v1122
    %v1124 = vsub.f32 1.0, %v1123
    %v1125 = vmul.f32 %v1122, %v1124
    %v1126 = vadd.f32 %v1122, %v1125
    %vm1127 = vweird.f32 %v1121
    %vm1128 = vweird.f32 %v1122
    %vm1129 = vmor %vm1127, %vm1128
    %v1130 = vsel %vm1129, %v1122, %v1126
    %v1131 = vand.u32 2147483647, %v1121
    %vm1132 = vcmp.eq.f32.partialorder %v1131, 8.507059e+37
    %v1133 = vand.u32 %v1121, 2147483648
    %v1134 = vor.u32 1.1754944e-38, %v1133
    %v1135 = vsel %vm1132, %v1134, %v1130
    %v1136 = vmul.f32 1.0, %v1135
    %v1137 = vmul.f32 %v1116, %v921
    %v1138 = vmul.f32 %v1097, %v1117
    %v1139 = vadd.f32 %v1137, %v1138
    %v1140 = vtanh.pop %v1139
    %v1141 = vmul.f32 %v1136, %v1140
    %s1142 = scalar_lea.vmem [#allocation9], 32
    %1143 = vst [vmem:[%s1142] sm:$0xff] %v1141
    %s1144 = scalar_lea.vmem [#allocation4], 160
    %v1145 = vld [vmem:[%s1144] sm:$0xff]
    %v1146 = vld [vmem:[%s1144 + $0x8] sm:$0xff]
    %v1147 = vld [vmem:[%s1144 + $0x10] sm:$0xff]
    %v1148 = vld [vmem:[%s1144 + $0x18] sm:$0xff]
    %v1149 = vld [vmem:[#allocation7] sm:$0xff]
    %v1150 = vld [vmem:[#allocation7 + $0x8] sm:$0xff]
    %v1151 = vld [vmem:[#allocation7 + $0x10] sm:$0xff]
    %v1152 = vld [vmem:[#allocation7 + $0x18] sm:$0xff]
    %v1153 = vld [vmem:[#allocation7 + $0x20] sm:$0xff]
    %v1154 = vld [vmem:[#allocation7 + $0x28] sm:$0xff]
    %v1155 = vld [vmem:[#allocation7 + $0x30] sm:$0xff]
    %v1156 = vld [vmem:[#allocation7 + $0x38] sm:$0xff]
    %v1157 = vld [vmem:[#allocation7 + $0x40] sm:$0xff]
    %v1158 = vld [vmem:[#allocation7 + $0x48] sm:$0xff]
    %v1159 = vld [vmem:[#allocation7 + $0x50] sm:$0xff]
    %v1160 = vld [vmem:[#allocation7 + $0x58] sm:$0xff]
    %v1161 = vld [vmem:[#allocation7 + $0x60] sm:$0xff]
    %v1162 = vld [vmem:[#allocation7 + $0x68] sm:$0xff]
    %v1163 = vld [vmem:[#allocation7 + $0x70] sm:$0xff]
    %v1164 = vld [vmem:[#allocation7 + $0x78] sm:$0xff]
    %v1165 = vld [vmem:[#allocation7 + $0x80] sm:$0xff]
    %v1166 = vld [vmem:[#allocation7 + $0x88] sm:$0xff]
    %v1167 = vld [vmem:[#allocation7 + $0x90] sm:$0xff]
    %v1168 = vld [vmem:[#allocation7 + $0x98] sm:$0xff]
    %v1169 = vld [vmem:[#allocation7 + $0xa0] sm:$0xff]
    %v1170 = vld [vmem:[#allocation7 + $0xa8] sm:$0xff]
    %v1171 = vld [vmem:[#allocation7 + $0xb0] sm:$0xff]
    %v1172 = vld [vmem:[#allocation7 + $0xb8] sm:$0xff]
    %v1173 = vld [vmem:[#allocation7 + $0xc0] sm:$0xff]
    %v1174 = vld [vmem:[#allocation7 + $0xc8] sm:$0xff]
    %v1175 = vld [vmem:[#allocation7 + $0xd0] sm:$0xff]
    %v1176 = vld [vmem:[#allocation7 + $0xd8] sm:$0xff]
    %v1177 = vld [vmem:[#allocation7 + $0xe0] sm:$0xff]
    %v1178 = vld [vmem:[#allocation7 + $0xe8] sm:$0xff]
    %v1179 = vld [vmem:[#allocation7 + $0xf0] sm:$0xff]
    %v1180 = vld [vmem:[#allocation7 + $0xf8] sm:$0xff]
    %v1181 = vld [vmem:[#allocation7 + $0x100] sm:$0xff]
    %v1182 = vld [vmem:[#allocation7 + $0x108] sm:$0xff]
    %v1183 = vld [vmem:[#allocation7 + $0x110] sm:$0xff]
    %v1184 = vld [vmem:[#allocation7 + $0x118] sm:$0xff]
    %v1185 = vld [vmem:[#allocation7 + $0x120] sm:$0xff]
    %v1186 = vld [vmem:[#allocation7 + $0x128] sm:$0xff]
    %v1187 = vld [vmem:[#allocation7 + $0x130] sm:$0xff]
    %v1188 = vld [vmem:[#allocation7 + $0x138] sm:$0xff]
    %v1189 = vld [vmem:[#allocation7 + $0x140] sm:$0xff]
    %v1190 = vld [vmem:[#allocation7 + $0x148] sm:$0xff]
    %v1191 = vld [vmem:[#allocation7 + $0x150] sm:$0xff]
    %v1192 = vld [vmem:[#allocation7 + $0x158] sm:$0xff]
    %v1193 = vld [vmem:[#allocation7 + $0x160] sm:$0xff]
    %v1194 = vld [vmem:[#allocation7 + $0x168] sm:$0xff]
    %v1195 = vld [vmem:[#allocation7 + $0x170] sm:$0xff]
    %v1196 = vld [vmem:[#allocation7 + $0x178] sm:$0xff]
    %v1197 = vld [vmem:[#allocation7 + $0x180] sm:$0xff]
    %v1198 = vld [vmem:[#allocation7 + $0x188] sm:$0xff]
    %v1199 = vld [vmem:[#allocation7 + $0x190] sm:$0xff]
    %v1200 = vld [vmem:[#allocation7 + $0x198] sm:$0xff]
    %v1201 = vld [vmem:[#allocation7 + $0x1a0] sm:$0xff]
    %v1202 = vld [vmem:[#allocation7 + $0x1a8] sm:$0xff]
    %v1203 = vld [vmem:[#allocation7 + $0x1b0] sm:$0xff]
    %v1204 = vld [vmem:[#allocation7 + $0x1b8] sm:$0xff]
    %v1205 = vld [vmem:[#allocation7 + $0x1c0] sm:$0xff]
    %v1206 = vld [vmem:[#allocation7 + $0x1c8] sm:$0xff]
    %v1207 = vld [vmem:[#allocation7 + $0x1d0] sm:$0xff]
    %v1208 = vld [vmem:[#allocation7 + $0x1d8] sm:$0xff]
    %v1209 = vld [vmem:[#allocation7 + $0x1e0] sm:$0xff]
    %v1210 = vld [vmem:[#allocation7 + $0x1e8] sm:$0xff]
    %v1211 = vld [vmem:[#allocation7 + $0x1f0] sm:$0xff]
    %v1212 = vld [vmem:[#allocation7 + $0x1f8] sm:$0xff]
    %1213 = vmatpush.msra.mxu0 %v1209
    %1214 = vmatpush.msra.mxu0 %v1205
    %1215 = vmatpush.msra.mxu0 %v1201
    %1216 = vmatpush.msra.mxu0 %v1197
    %1217 = vmatpush.msra.mxu0 %v1193
    %1218 = vmatpush.msra.mxu0 %v1189
    %1219 = vmatpush.msra.mxu0 %v1185
    %1220 = vmatpush.msra.mxu0 %v1181
    %1221 = vmatpush.msra.mxu0 %v1177
    %1222 = vmatpush.msra.mxu0 %v1173
    %1223 = vmatpush.msra.mxu0 %v1169
    %1224 = vmatpush.msra.mxu0 %v1165
    %1225 = vmatpush.msra.mxu0 %v1161
    %1226 = vmatpush.msra.mxu0 %v1157
    %1227 = vmatpush.msra.mxu0 %v1153
    %1228 = vmatpush.msra.mxu0 %v1149
    %1229 = vmatmul.f32.gmra.mxu0 %v1141
    %v1230 = vpop.f32.mrf.mxu0
    %v1231 = vadd.f32 0.0, %v1230
    %1232 = vdwg.mxu0
    %1233 = vmatpush.msra.mxu0 %v1210
    %1234 = vmatpush.msra.mxu0 %v1206
    %1235 = vmatpush.msra.mxu0 %v1202
    %1236 = vmatpush.msra.mxu0 %v1198
    %1237 = vmatpush.msra.mxu0 %v1194
    %1238 = vmatpush.msra.mxu0 %v1190
    %1239 = vmatpush.msra.mxu0 %v1186
    %1240 = vmatpush.msra.mxu0 %v1182
    %1241 = vmatpush.msra.mxu0 %v1178
    %1242 = vmatpush.msra.mxu0 %v1174
    %1243 = vmatpush.msra.mxu0 %v1170
    %1244 = vmatpush.msra.mxu0 %v1166
    %1245 = vmatpush.msra.mxu0 %v1162
    %1246 = vmatpush.msra.mxu0 %v1158
    %1247 = vmatpush.msra.mxu0 %v1154
    %1248 = vmatpush.msra.mxu0 %v1150
    %1249 = vmatmul.f32.gmra.mxu0 %v1141
    %v1250 = vpop.f32.mrf.mxu0
    %v1251 = vadd.f32 0.0, %v1250
    %1252 = vdwg.mxu0
    %1253 = vmatpush.msra.mxu0 %v1211
    %1254 = vmatpush.msra.mxu0 %v1207
    %1255 = vmatpush.msra.mxu0 %v1203
    %1256 = vmatpush.msra.mxu0 %v1199
    %1257 = vmatpush.msra.mxu0 %v1195
    %1258 = vmatpush.msra.mxu0 %v1191
    %1259 = vmatpush.msra.mxu0 %v1187
    %1260 = vmatpush.msra.mxu0 %v1183
    %1261 = vmatpush.msra.mxu0 %v1179
    %1262 = vmatpush.msra.mxu0 %v1175
    %1263 = vmatpush.msra.mxu0 %v1171
    %1264 = vmatpush.msra.mxu0 %v1167
    %1265 = vmatpush.msra.mxu0 %v1163
    %1266 = vmatpush.msra.mxu0 %v1159
    %1267 = vmatpush.msra.mxu0 %v1155
    %1268 = vmatpush.msra.mxu0 %v1151
    %1269 = vmatmul.f32.gmra.mxu0 %v1141
    %v1270 = vpop.f32.mrf.mxu0
    %v1271 = vadd.f32 0.0, %v1270
    %1272 = vdwg.mxu0
    %1273 = vmatpush.msra.mxu0 %v1212
    %1274 = vmatpush.msra.mxu0 %v1208
    %1275 = vmatpush.msra.mxu0 %v1204
    %1276 = vmatpush.msra.mxu0 %v1200
    %1277 = vmatpush.msra.mxu0 %v1196
    %1278 = vmatpush.msra.mxu0 %v1192
    %1279 = vmatpush.msra.mxu0 %v1188
    %1280 = vmatpush.msra.mxu0 %v1184
    %1281 = vmatpush.msra.mxu0 %v1180
    %1282 = vmatpush.msra.mxu0 %v1176
    %1283 = vmatpush.msra.mxu0 %v1172
    %1284 = vmatpush.msra.mxu0 %v1168
    %1285 = vmatpush.msra.mxu0 %v1164
    %1286 = vmatpush.msra.mxu0 %v1160
    %1287 = vmatpush.msra.mxu0 %v1156
    %1288 = vmatpush.msra.mxu0 %v1152
    %1289 = vmatmul.f32.gmra.mxu0 %v1141
    %v1290 = vpop.f32.mrf.mxu0
    %v1291 = vadd.f32 0.0, %v1290
    %1292 = vdwg.mxu0
    %v1293 = vadd.f32 %v1145, %v1231
    %v1294 = vadd.f32 %v1146, %v1251
    %v1295 = vadd.f32 %v1147, %v1271
    %v1296 = vadd.f32 %v1148, %v1291
    %v1297 = vxor.u32 %v1293, 2147483648
    %v1298 = vmul.f32 %v1297, 1.442695
    %v1299 = vpow.pop %v1298
    %v1300 = vadd.f32 %v1299, 1.0
    %v1301 = vrcp.pop %v1300
    %v1302 = vmul.f32 %v1300, %v1301
    %v1303 = vsub.f32 1.0, %v1302
    %v1304 = vmul.f32 %v1301, %v1303
    %v1305 = vadd.f32 %v1301, %v1304
    %vm1306 = vweird.f32 %v1300
    %vm1307 = vweird.f32 %v1301
    %vm1308 = vmor %vm1306, %vm1307
    %v1309 = vsel %vm1308, %v1301, %v1305
    %v1310 = vand.u32 2147483647, %v1300
    %vm1311 = vcmp.eq.f32.partialorder %v1310, 8.507059e+37
    %v1312 = vand.u32 %v1300, 2147483648
    %v1313 = vor.u32 1.1754944e-38, %v1312
    %v1314 = vsel %vm1311, %v1313, %v1309
    %v1315 = vmul.f32 1.0, %v1314
    %v1316 = vxor.u32 %v1294, 2147483648
    %v1317 = vmul.f32 %v1316, 1.442695
    %v1318 = vpow.pop %v1317
    %v1319 = vadd.f32 %v1318, 1.0
    %v1320 = vrcp.pop %v1319
    %v1321 = vmul.f32 %v1319, %v1320
    %v1322 = vsub.f32 1.0, %v1321
    %v1323 = vmul.f32 %v1320, %v1322
    %v1324 = vadd.f32 %v1320, %v1323
    %vm1325 = vweird.f32 %v1319
    %vm1326 = vweird.f32 %v1320
    %vm1327 = vmor %vm1325, %vm1326
    %v1328 = vsel %vm1327, %v1320, %v1324
    %v1329 = vand.u32 2147483647, %v1319
    %vm1330 = vcmp.eq.f32.partialorder %v1329, 8.507059e+37
    %v1331 = vand.u32 %v1319, 2147483648
    %v1332 = vor.u32 1.1754944e-38, %v1331
    %v1333 = vsel %vm1330, %v1332, %v1328
    %v1334 = vmul.f32 1.0, %v1333
    %v1335 = vtanh.pop %v1295
    %v1336 = vxor.u32 %v1296, 2147483648
    %v1337 = vmul.f32 %v1336, 1.442695
    %v1338 = vpow.pop %v1337
    %v1339 = vadd.f32 %v1338, 1.0
    %v1340 = vrcp.pop %v1339
    %v1341 = vmul.f32 %v1339, %v1340
    %v1342 = vsub.f32 1.0, %v1341
    %v1343 = vmul.f32 %v1340, %v1342
    %v1344 = vadd.f32 %v1340, %v1343
    %vm1345 = vweird.f32 %v1339
    %vm1346 = vweird.f32 %v1340
    %vm1347 = vmor %vm1345, %vm1346
    %v1348 = vsel %vm1347, %v1340, %v1344
    %v1349 = vand.u32 2147483647, %v1339
    %vm1350 = vcmp.eq.f32.partialorder %v1349, 8.507059e+37
    %v1351 = vand.u32 %v1339, 2147483648
    %v1352 = vor.u32 1.1754944e-38, %v1351
    %v1353 = vsel %vm1350, %v1352, %v1348
    %v1354 = vmul.f32 1.0, %v1353
    %v1355 = vmul.f32 %v1334, %v1139
    %v1356 = vmul.f32 %v1315, %v1335
    %v1357 = vadd.f32 %v1355, %v1356
    %v1358 = vtanh.pop %v1357
    %v1359 = vmul.f32 %v1354, %v1358
    %s1360 = scalar_lea.vmem [#allocation9], 40
    %1361 = vst [vmem:[%s1360] sm:$0xff] %v1359
    %s1362 = scalar_lea.vmem [#allocation4], 192
    %v1363 = vld [vmem:[%s1362] sm:$0xff]
    %v1364 = vld [vmem:[%s1362 + $0x8] sm:$0xff]
    %v1365 = vld [vmem:[%s1362 + $0x10] sm:$0xff]
    %v1366 = vld [vmem:[%s1362 + $0x18] sm:$0xff]
    %v1367 = vld [vmem:[#allocation7] sm:$0xff]
    %v1368 = vld [vmem:[#allocation7 + $0x8] sm:$0xff]
    %v1369 = vld [vmem:[#allocation7 + $0x10] sm:$0xff]
    %v1370 = vld [vmem:[#allocation7 + $0x18] sm:$0xff]
    %v1371 = vld [vmem:[#allocation7 + $0x20] sm:$0xff]
    %v1372 = vld [vmem:[#allocation7 + $0x28] sm:$0xff]
    %v1373 = vld [vmem:[#allocation7 + $0x30] sm:$0xff]
    %v1374 = vld [vmem:[#allocation7 + $0x38] sm:$0xff]
    %v1375 = vld [vmem:[#allocation7 + $0x40] sm:$0xff]
    %v1376 = vld [vmem:[#allocation7 + $0x48] sm:$0xff]
    %v1377 = vld [vmem:[#allocation7 + $0x50] sm:$0xff]
    %v1378 = vld [vmem:[#allocation7 + $0x58] sm:$0xff]
    %v1379 = vld [vmem:[#allocation7 + $0x60] sm:$0xff]
    %v1380 = vld [vmem:[#allocation7 + $0x68] sm:$0xff]
    %v1381 = vld [vmem:[#allocation7 + $0x70] sm:$0xff]
    %v1382 = vld [vmem:[#allocation7 + $0x78] sm:$0xff]
    %v1383 = vld [vmem:[#allocation7 + $0x80] sm:$0xff]
    %v1384 = vld [vmem:[#allocation7 + $0x88] sm:$0xff]
    %v1385 = vld [vmem:[#allocation7 + $0x90] sm:$0xff]
    %v1386 = vld [vmem:[#allocation7 + $0x98] sm:$0xff]
    %v1387 = vld [vmem:[#allocation7 + $0xa0] sm:$0xff]
    %v1388 = vld [vmem:[#allocation7 + $0xa8] sm:$0xff]
    %v1389 = vld [vmem:[#allocation7 + $0xb0] sm:$0xff]
    %v1390 = vld [vmem:[#allocation7 + $0xb8] sm:$0xff]
    %v1391 = vld [vmem:[#allocation7 + $0xc0] sm:$0xff]
    %v1392 = vld [vmem:[#allocation7 + $0xc8] sm:$0xff]
    %v1393 = vld [vmem:[#allocation7 + $0xd0] sm:$0xff]
    %v1394 = vld [vmem:[#allocation7 + $0xd8] sm:$0xff]
    %v1395 = vld [vmem:[#allocation7 + $0xe0] sm:$0xff]
    %v1396 = vld [vmem:[#allocation7 + $0xe8] sm:$0xff]
    %v1397 = vld [vmem:[#allocation7 + $0xf0] sm:$0xff]
    %v1398 = vld [vmem:[#allocation7 + $0xf8] sm:$0xff]
    %v1399 = vld [vmem:[#allocation7 + $0x100] sm:$0xff]
    %v1400 = vld [vmem:[#allocation7 + $0x108] sm:$0xff]
    %v1401 = vld [vmem:[#allocation7 + $0x110] sm:$0xff]
    %v1402 = vld [vmem:[#allocation7 + $0x118] sm:$0xff]
    %v1403 = vld [vmem:[#allocation7 + $0x120] sm:$0xff]
    %v1404 = vld [vmem:[#allocation7 + $0x128] sm:$0xff]
    %v1405 = vld [vmem:[#allocation7 + $0x130] sm:$0xff]
    %v1406 = vld [vmem:[#allocation7 + $0x138] sm:$0xff]
    %v1407 = vld [vmem:[#allocation7 + $0x140] sm:$0xff]
    %v1408 = vld [vmem:[#allocation7 + $0x148] sm:$0xff]
    %v1409 = vld [vmem:[#allocation7 + $0x150] sm:$0xff]
    %v1410 = vld [vmem:[#allocation7 + $0x158] sm:$0xff]
    %v1411 = vld [vmem:[#allocation7 + $0x160] sm:$0xff]
    %v1412 = vld [vmem:[#allocation7 + $0x168] sm:$0xff]
    %v1413 = vld [vmem:[#allocation7 + $0x170] sm:$0xff]
    %v1414 = vld [vmem:[#allocation7 + $0x178] sm:$0xff]
    %v1415 = vld [vmem:[#allocation7 + $0x180] sm:$0xff]
    %v1416 = vld [vmem:[#allocation7 + $0x188] sm:$0xff]
    %v1417 = vld [vmem:[#allocation7 + $0x190] sm:$0xff]
    %v1418 = vld [vmem:[#allocation7 + $0x198] sm:$0xff]
    %v1419 = vld [vmem:[#allocation7 + $0x1a0] sm:$0xff]
    %v1420 = vld [vmem:[#allocation7 + $0x1a8] sm:$0xff]
    %v1421 = vld [vmem:[#allocation7 + $0x1b0] sm:$0xff]
    %v1422 = vld [vmem:[#allocation7 + $0x1b8] sm:$0xff]
    %v1423 = vld [vmem:[#allocation7 + $0x1c0] sm:$0xff]
    %v1424 = vld [vmem:[#allocation7 + $0x1c8] sm:$0xff]
    %v1425 = vld [vmem:[#allocation7 + $0x1d0] sm:$0xff]
    %v1426 = vld [vmem:[#allocation7 + $0x1d8] sm:$0xff]
    %v1427 = vld [vmem:[#allocation7 + $0x1e0] sm:$0xff]
    %v1428 = vld [vmem:[#allocation7 + $0x1e8] sm:$0xff]
    %v1429 = vld [vmem:[#allocation7 + $0x1f0] sm:$0xff]
    %v1430 = vld [vmem:[#allocation7 + $0x1f8] sm:$0xff]
    %1431 = vmatpush.msra.mxu0 %v1427
    %1432 = vmatpush.msra.mxu0 %v1423
    %1433 = vmatpush.msra.mxu0 %v1419
    %1434 = vmatpush.msra.mxu0 %v1415
    %1435 = vmatpush.msra.mxu0 %v1411
    %1436 = vmatpush.msra.mxu0 %v1407
    %1437 = vmatpush.msra.mxu0 %v1403
    %1438 = vmatpush.msra.mxu0 %v1399
    %1439 = vmatpush.msra.mxu0 %v1395
    %1440 = vmatpush.msra.mxu0 %v1391
    %1441 = vmatpush.msra.mxu0 %v1387
    %1442 = vmatpush.msra.mxu0 %v1383
    %1443 = vmatpush.msra.mxu0 %v1379
    %1444 = vmatpush.msra.mxu0 %v1375
    %1445 = vmatpush.msra.mxu0 %v1371
    %1446 = vmatpush.msra.mxu0 %v1367
    %1447 = vmatmul.f32.gmra.mxu0 %v1359
    %v1448 = vpop.f32.mrf.mxu0
    %v1449 = vadd.f32 0.0, %v1448
    %1450 = vdwg.mxu0
    %1451 = vmatpush.msra.mxu0 %v1428
    %1452 = vmatpush.msra.mxu0 %v1424
    %1453 = vmatpush.msra.mxu0 %v1420
    %1454 = vmatpush.msra.mxu0 %v1416
    %1455 = vmatpush.msra.mxu0 %v1412
    %1456 = vmatpush.msra.mxu0 %v1408
    %1457 = vmatpush.msra.mxu0 %v1404
    %1458 = vmatpush.msra.mxu0 %v1400
    %1459 = vmatpush.msra.mxu0 %v1396
    %1460 = vmatpush.msra.mxu0 %v1392
    %1461 = vmatpush.msra.mxu0 %v1388
    %1462 = vmatpush.msra.mxu0 %v1384
    %1463 = vmatpush.msra.mxu0 %v1380
    %1464 = vmatpush.msra.mxu0 %v1376
    %1465 = vmatpush.msra.mxu0 %v1372
    %1466 = vmatpush.msra.mxu0 %v1368
    %1467 = vmatmul.f32.gmra.mxu0 %v1359
    %v1468 = vpop.f32.mrf.mxu0
    %v1469 = vadd.f32 0.0, %v1468
    %1470 = vdwg.mxu0
    %1471 = vmatpush.msra.mxu0 %v1429
    %1472 = vmatpush.msra.mxu0 %v1425
    %1473 = vmatpush.msra.mxu0 %v1421
    %1474 = vmatpush.msra.mxu0 %v1417
    %1475 = vmatpush.msra.mxu0 %v1413
    %1476 = vmatpush.msra.mxu0 %v1409
    %1477 = vmatpush.msra.mxu0 %v1405
    %1478 = vmatpush.msra.mxu0 %v1401
    %1479 = vmatpush.msra.mxu0 %v1397
    %1480 = vmatpush.msra.mxu0 %v1393
    %1481 = vmatpush.msra.mxu0 %v1389
    %1482 = vmatpush.msra.mxu0 %v1385
    %1483 = vmatpush.msra.mxu0 %v1381
    %1484 = vmatpush.msra.mxu0 %v1377
    %1485 = vmatpush.msra.mxu0 %v1373
    %1486 = vmatpush.msra.mxu0 %v1369
    %1487 = vmatmul.f32.gmra.mxu0 %v1359
    %v1488 = vpop.f32.mrf.mxu0
    %v1489 = vadd.f32 0.0, %v1488
    %1490 = vdwg.mxu0
    %1491 = vmatpush.msra.mxu0 %v1430
    %1492 = vmatpush.msra.mxu0 %v1426
    %1493 = vmatpush.msra.mxu0 %v1422
    %1494 = vmatpush.msra.mxu0 %v1418
    %1495 = vmatpush.msra.mxu0 %v1414
    %1496 = vmatpush.msra.mxu0 %v1410
    %1497 = vmatpush.msra.mxu0 %v1406
    %1498 = vmatpush.msra.mxu0 %v1402
    %1499 = vmatpush.msra.mxu0 %v1398
    %1500 = vmatpush.msra.mxu0 %v1394
    %1501 = vmatpush.msra.mxu0 %v1390
    %1502 = vmatpush.msra.mxu0 %v1386
    %1503 = vmatpush.msra.mxu0 %v1382
    %1504 = vmatpush.msra.mxu0 %v1378
    %1505 = vmatpush.msra.mxu0 %v1374
    %1506 = vmatpush.msra.mxu0 %v1370
    %1507 = vmatmul.f32.gmra.mxu0 %v1359
    %v1508 = vpop.f32.mrf.mxu0
    %v1509 = vadd.f32 0.0, %v1508
    %1510 = vdwg.mxu0
    %v1511 = vadd.f32 %v1363, %v1449
    %v1512 = vadd.f32 %v1364, %v1469
    %v1513 = vadd.f32 %v1365, %v1489
    %v1514 = vadd.f32 %v1366, %v1509
    %v1515 = vxor.u32 %v1511, 2147483648
    %v1516 = vmul.f32 %v1515, 1.442695
    %v1517 = vpow.pop %v1516
    %v1518 = vadd.f32 %v1517, 1.0
    %v1519 = vrcp.pop %v1518
    %v1520 = vmul.f32 %v1518, %v1519
    %v1521 = vsub.f32 1.0, %v1520
    %v1522 = vmul.f32 %v1519, %v1521
    %v1523 = vadd.f32 %v1519, %v1522
    %vm1524 = vweird.f32 %v1518
    %vm1525 = vweird.f32 %v1519
    %vm1526 = vmor %vm1524, %vm1525
    %v1527 = vsel %vm1526, %v1519, %v1523
    %v1528 = vand.u32 2147483647, %v1518
    %vm1529 = vcmp.eq.f32.partialorder %v1528, 8.507059e+37
    %v1530 = vand.u32 %v1518, 2147483648
    %v1531 = vor.u32 1.1754944e-38, %v1530
    %v1532 = vsel %vm1529, %v1531, %v1527
    %v1533 = vmul.f32 1.0, %v1532
    %v1534 = vxor.u32 %v1512, 2147483648
    %v1535 = vmul.f32 %v1534, 1.442695
    %v1536 = vpow.pop %v1535
    %v1537 = vadd.f32 %v1536, 1.0
    %v1538 = vrcp.pop %v1537
    %v1539 = vmul.f32 %v1537, %v1538
    %v1540 = vsub.f32 1.0, %v1539
    %v1541 = vmul.f32 %v1538, %v1540
    %v1542 = vadd.f32 %v1538, %v1541
    %vm1543 = vweird.f32 %v1537
    %vm1544 = vweird.f32 %v1538
    %vm1545 = vmor %vm1543, %vm1544
    %v1546 = vsel %vm1545, %v1538, %v1542
    %v1547 = vand.u32 2147483647, %v1537
    %vm1548 = vcmp.eq.f32.partialorder %v1547, 8.507059e+37
    %v1549 = vand.u32 %v1537, 2147483648
    %v1550 = vor.u32 1.1754944e-38, %v1549
    %v1551 = vsel %vm1548, %v1550, %v1546
    %v1552 = vmul.f32 1.0, %v1551
    %v1553 = vtanh.pop %v1513
    %v1554 = vxor.u32 %v1514, 2147483648
    %v1555 = vmul.f32 %v1554, 1.442695
    %v1556 = vpow.pop %v1555
    %v1557 = vadd.f32 %v1556, 1.0
    %v1558 = vrcp.pop %v1557
    %v1559 = vmul.f32 %v1557, %v1558
    %v1560 = vsub.f32 1.0, %v1559
    %v1561 = vmul.f32 %v1558, %v1560
    %v1562 = vadd.f32 %v1558, %v1561
    %vm1563 = vweird.f32 %v1557
    %vm1564 = vweird.f32 %v1558
    %vm1565 = vmor %vm1563, %vm1564
    %v1566 = vsel %vm1565, %v1558, %v1562
    %v1567 = vand.u32 2147483647, %v1557
    %vm1568 = vcmp.eq.f32.partialorder %v1567, 8.507059e+37
    %v1569 = vand.u32 %v1557, 2147483648
    %v1570 = vor.u32 1.1754944e-38, %v1569
    %v1571 = vsel %vm1568, %v1570, %v1566
    %v1572 = vmul.f32 1.0, %v1571
    %v1573 = vmul.f32 %v1552, %v1357
    %v1574 = vmul.f32 %v1533, %v1553
    %v1575 = vadd.f32 %v1573, %v1574
    %v1576 = vtanh.pop %v1575
    %v1577 = vmul.f32 %v1572, %v1576
    %s1578 = scalar_lea.vmem [#allocation9], 48
    %1579 = vst [vmem:[%s1578] sm:$0xff] %v1577
    %s1580 = scalar_lea.vmem [#allocation4], 224
    %v1581 = vld [vmem:[%s1580] sm:$0xff]
    %v1582 = vld [vmem:[%s1580 + $0x8] sm:$0xff]
    %v1583 = vld [vmem:[%s1580 + $0x10] sm:$0xff]
    %v1584 = vld [vmem:[%s1580 + $0x18] sm:$0xff]
    %v1585 = vld [vmem:[#allocation7] sm:$0xff]
    %v1586 = vld [vmem:[#allocation7 + $0x8] sm:$0xff]
    %v1587 = vld [vmem:[#allocation7 + $0x10] sm:$0xff]
    %v1588 = vld [vmem:[#allocation7 + $0x18] sm:$0xff]
    %v1589 = vld [vmem:[#allocation7 + $0x20] sm:$0xff]
    %v1590 = vld [vmem:[#allocation7 + $0x28] sm:$0xff]
    %v1591 = vld [vmem:[#allocation7 + $0x30] sm:$0xff]
    %v1592 = vld [vmem:[#allocation7 + $0x38] sm:$0xff]
    %v1593 = vld [vmem:[#allocation7 + $0x40] sm:$0xff]
    %v1594 = vld [vmem:[#allocation7 + $0x48] sm:$0xff]
    %v1595 = vld [vmem:[#allocation7 + $0x50] sm:$0xff]
    %v1596 = vld [vmem:[#allocation7 + $0x58] sm:$0xff]
    %v1597 = vld [vmem:[#allocation7 + $0x60] sm:$0xff]
    %v1598 = vld [vmem:[#allocation7 + $0x68] sm:$0xff]
    %v1599 = vld [vmem:[#allocation7 + $0x70] sm:$0xff]
    %v1600 = vld [vmem:[#allocation7 + $0x78] sm:$0xff]
    %v1601 = vld [vmem:[#allocation7 + $0x80] sm:$0xff]
    %v1602 = vld [vmem:[#allocation7 + $0x88] sm:$0xff]
    %v1603 = vld [vmem:[#allocation7 + $0x90] sm:$0xff]
    %v1604 = vld [vmem:[#allocation7 + $0x98] sm:$0xff]
    %v1605 = vld [vmem:[#allocation7 + $0xa0] sm:$0xff]
    %v1606 = vld [vmem:[#allocation7 + $0xa8] sm:$0xff]
    %v1607 = vld [vmem:[#allocation7 + $0xb0] sm:$0xff]
    %v1608 = vld [vmem:[#allocation7 + $0xb8] sm:$0xff]
    %v1609 = vld [vmem:[#allocation7 + $0xc0] sm:$0xff]
    %v1610 = vld [vmem:[#allocation7 + $0xc8] sm:$0xff]
    %v1611 = vld [vmem:[#allocation7 + $0xd0] sm:$0xff]
    %v1612 = vld [vmem:[#allocation7 + $0xd8] sm:$0xff]
    %v1613 = vld [vmem:[#allocation7 + $0xe0] sm:$0xff]
    %v1614 = vld [vmem:[#allocation7 + $0xe8] sm:$0xff]
    %v1615 = vld [vmem:[#allocation7 + $0xf0] sm:$0xff]
    %v1616 = vld [vmem:[#allocation7 + $0xf8] sm:$0xff]
    %v1617 = vld [vmem:[#allocation7 + $0x100] sm:$0xff]
    %v1618 = vld [vmem:[#allocation7 + $0x108] sm:$0xff]
    %v1619 = vld [vmem:[#allocation7 + $0x110] sm:$0xff]
    %v1620 = vld [vmem:[#allocation7 + $0x118] sm:$0xff]
    %v1621 = vld [vmem:[#allocation7 + $0x120] sm:$0xff]
    %v1622 = vld [vmem:[#allocation7 + $0x128] sm:$0xff]
    %v1623 = vld [vmem:[#allocation7 + $0x130] sm:$0xff]
    %v1624 = vld [vmem:[#allocation7 + $0x138] sm:$0xff]
    %v1625 = vld [vmem:[#allocation7 + $0x140] sm:$0xff]
    %v1626 = vld [vmem:[#allocation7 + $0x148] sm:$0xff]
    %v1627 = vld [vmem:[#allocation7 + $0x150] sm:$0xff]
    %v1628 = vld [vmem:[#allocation7 + $0x158] sm:$0xff]
    %v1629 = vld [vmem:[#allocation7 + $0x160] sm:$0xff]
    %v1630 = vld [vmem:[#allocation7 + $0x168] sm:$0xff]
    %v1631 = vld [vmem:[#allocation7 + $0x170] sm:$0xff]
    %v1632 = vld [vmem:[#allocation7 + $0x178] sm:$0xff]
    %v1633 = vld [vmem:[#allocation7 + $0x180] sm:$0xff]
    %v1634 = vld [vmem:[#allocation7 + $0x188] sm:$0xff]
    %v1635 = vld [vmem:[#allocation7 + $0x190] sm:$0xff]
    %v1636 = vld [vmem:[#allocation7 + $0x198] sm:$0xff]
    %v1637 = vld [vmem:[#allocation7 + $0x1a0] sm:$0xff]
    %v1638 = vld [vmem:[#allocation7 + $0x1a8] sm:$0xff]
    %v1639 = vld [vmem:[#allocation7 + $0x1b0] sm:$0xff]
    %v1640 = vld [vmem:[#allocation7 + $0x1b8] sm:$0xff]
    %v1641 = vld [vmem:[#allocation7 + $0x1c0] sm:$0xff]
    %v1642 = vld [vmem:[#allocation7 + $0x1c8] sm:$0xff]
    %v1643 = vld [vmem:[#allocation7 + $0x1d0] sm:$0xff]
    %v1644 = vld [vmem:[#allocation7 + $0x1d8] sm:$0xff]
    %v1645 = vld [vmem:[#allocation7 + $0x1e0] sm:$0xff]
    %v1646 = vld [vmem:[#allocation7 + $0x1e8] sm:$0xff]
    %v1647 = vld [vmem:[#allocation7 + $0x1f0] sm:$0xff]
    %v1648 = vld [vmem:[#allocation7 + $0x1f8] sm:$0xff]
    %1649 = vmatpush.msra.mxu0 %v1645
    %1650 = vmatpush.msra.mxu0 %v1641
    %1651 = vmatpush.msra.mxu0 %v1637
    %1652 = vmatpush.msra.mxu0 %v1633
    %1653 = vmatpush.msra.mxu0 %v1629
    %1654 = vmatpush.msra.mxu0 %v1625
    %1655 = vmatpush.msra.mxu0 %v1621
    %1656 = vmatpush.msra.mxu0 %v1617
    %1657 = vmatpush.msra.mxu0 %v1613
    %1658 = vmatpush.msra.mxu0 %v1609
    %1659 = vmatpush.msra.mxu0 %v1605
    %1660 = vmatpush.msra.mxu0 %v1601
    %1661 = vmatpush.msra.mxu0 %v1597
    %1662 = vmatpush.msra.mxu0 %v1593
    %1663 = vmatpush.msra.mxu0 %v1589
    %1664 = vmatpush.msra.mxu0 %v1585
    %1665 = vmatmul.f32.gmra.mxu0 %v1577
    %v1666 = vpop.f32.mrf.mxu0
    %v1667 = vadd.f32 0.0, %v1666
    %1668 = vdwg.mxu0
    %1669 = vmatpush.msra.mxu0 %v1646
    %1670 = vmatpush.msra.mxu0 %v1642
    %1671 = vmatpush.msra.mxu0 %v1638
    %1672 = vmatpush.msra.mxu0 %v1634
    %1673 = vmatpush.msra.mxu0 %v1630
    %1674 = vmatpush.msra.mxu0 %v1626
    %1675 = vmatpush.msra.mxu0 %v1622
    %1676 = vmatpush.msra.mxu0 %v1618
    %1677 = vmatpush.msra.mxu0 %v1614
    %1678 = vmatpush.msra.mxu0 %v1610
    %1679 = vmatpush.msra.mxu0 %v1606
    %1680 = vmatpush.msra.mxu0 %v1602
    %1681 = vmatpush.msra.mxu0 %v1598
    %1682 = vmatpush.msra.mxu0 %v1594
    %1683 = vmatpush.msra.mxu0 %v1590
    %1684 = vmatpush.msra.mxu0 %v1586
    %1685 = vmatmul.f32.gmra.mxu0 %v1577
    %v1686 = vpop.f32.mrf.mxu0
    %v1687 = vadd.f32 0.0, %v1686
    %1688 = vdwg.mxu0
    %1689 = vmatpush.msra.mxu0 %v1647
    %1690 = vmatpush.msra.mxu0 %v1643
    %1691 = vmatpush.msra.mxu0 %v1639
    %1692 = vmatpush.msra.mxu0 %v1635
    %1693 = vmatpush.msra.mxu0 %v1631
    %1694 = vmatpush.msra.mxu0 %v1627
    %1695 = vmatpush.msra.mxu0 %v1623
    %1696 = vmatpush.msra.mxu0 %v1619
    %1697 = vmatpush.msra.mxu0 %v1615
    %1698 = vmatpush.msra.mxu0 %v1611
    %1699 = vmatpush.msra.mxu0 %v1607
    %1700 = vmatpush.msra.mxu0 %v1603
    %1701 = vmatpush.msra.mxu0 %v1599
    %1702 = vmatpush.msra.mxu0 %v1595
    %1703 = vmatpush.msra.mxu0 %v1591
    %1704 = vmatpush.msra.mxu0 %v1587
    %1705 = vmatmul.f32.gmra.mxu0 %v1577
    %v1706 = vpop.f32.mrf.mxu0
    %v1707 = vadd.f32 0.0, %v1706
    %1708 = vdwg.mxu0
    %1709 = vmatpush.msra.mxu0 %v1648
    %1710 = vmatpush.msra.mxu0 %v1644
    %1711 = vmatpush.msra.mxu0 %v1640
    %1712 = vmatpush.msra.mxu0 %v1636
    %1713 = vmatpush.msra.mxu0 %v1632
    %1714 = vmatpush.msra.mxu0 %v1628
    %1715 = vmatpush.msra.mxu0 %v1624
    %1716 = vmatpush.msra.mxu0 %v1620
    %1717 = vmatpush.msra.mxu0 %v1616
    %1718 = vmatpush.msra.mxu0 %v1612
    %1719 = vmatpush.msra.mxu0 %v1608
    %1720 = vmatpush.msra.mxu0 %v1604
    %1721 = vmatpush.msra.mxu0 %v1600
    %1722 = vmatpush.msra.mxu0 %v1596
    %1723 = vmatpush.msra.mxu0 %v1592
    %1724 = vmatpush.msra.mxu0 %v1588
    %1725 = vmatmul.f32.gmra.mxu0 %v1577
    %v1726 = vpop.f32.mrf.mxu0
    %v1727 = vadd.f32 0.0, %v1726
    %1728 = vdwg.mxu0
    %v1729 = vadd.f32 %v1581, %v1667
    %v1730 = vadd.f32 %v1582, %v1687
    %v1731 = vadd.f32 %v1583, %v1707
    %v1732 = vadd.f32 %v1584, %v1727
    %v1733 = vxor.u32 %v1729, 2147483648
    %v1734 = vmul.f32 %v1733, 1.442695
    %v1735 = vpow.pop %v1734
    %v1736 = vadd.f32 %v1735, 1.0
    %v1737 = vrcp.pop %v1736
    %v1738 = vmul.f32 %v1736, %v1737
    %v1739 = vsub.f32 1.0, %v1738
    %v1740 = vmul.f32 %v1737, %v1739
    %v1741 = vadd.f32 %v1737, %v1740
    %vm1742 = vweird.f32 %v1736
    %vm1743 = vweird.f32 %v1737
    %vm1744 = vmor %vm1742, %vm1743
    %v1745 = vsel %vm1744, %v1737, %v1741
    %v1746 = vand.u32 2147483647, %v1736
    %vm1747 = vcmp.eq.f32.partialorder %v1746, 8.507059e+37
    %v1748 = vand.u32 %v1736, 2147483648
    %v1749 = vor.u32 1.1754944e-38, %v1748
    %v1750 = vsel %vm1747, %v1749, %v1745
    %v1751 = vmul.f32 1.0, %v1750
    %v1752 = vxor.u32 %v1730, 2147483648
    %v1753 = vmul.f32 %v1752, 1.442695
    %v1754 = vpow.pop %v1753
    %v1755 = vadd.f32 %v1754, 1.0
    %v1756 = vrcp.pop %v1755
    %v1757 = vmul.f32 %v1755, %v1756
    %v1758 = vsub.f32 1.0, %v1757
    %v1759 = vmul.f32 %v1756, %v1758
    %v1760 = vadd.f32 %v1756, %v1759
    %vm1761 = vweird.f32 %v1755
    %vm1762 = vweird.f32 %v1756
    %vm1763 = vmor %vm1761, %vm1762
    %v1764 = vsel %vm1763, %v1756, %v1760
    %v1765 = vand.u32 2147483647, %v1755
    %vm1766 = vcmp.eq.f32.partialorder %v1765, 8.507059e+37
    %v1767 = vand.u32 %v1755, 2147483648
    %v1768 = vor.u32 1.1754944e-38, %v1767
    %v1769 = vsel %vm1766, %v1768, %v1764
    %v1770 = vmul.f32 1.0, %v1769
    %v1771 = vtanh.pop %v1731
    %v1772 = vxor.u32 %v1732, 2147483648
    %v1773 = vmul.f32 %v1772, 1.442695
    %v1774 = vpow.pop %v1773
    %v1775 = vadd.f32 %v1774, 1.0
    %v1776 = vrcp.pop %v1775
    %v1777 = vmul.f32 %v1775, %v1776
    %v1778 = vsub.f32 1.0, %v1777
    %v1779 = vmul.f32 %v1776, %v1778
    %v1780 = vadd.f32 %v1776, %v1779
    %vm1781 = vweird.f32 %v1775
    %vm1782 = vweird.f32 %v1776
    %vm1783 = vmor %vm1781, %vm1782
    %v1784 = vsel %vm1783, %v1776, %v1780
    %v1785 = vand.u32 2147483647, %v1775
    %vm1786 = vcmp.eq.f32.partialorder %v1785, 8.507059e+37
    %v1787 = vand.u32 %v1775, 2147483648
    %v1788 = vor.u32 1.1754944e-38, %v1787
    %v1789 = vsel %vm1786, %v1788, %v1784
    %v1790 = vmul.f32 1.0, %v1789
    %v1791 = vmul.f32 %v1770, %v1575
    %v1792 = vmul.f32 %v1751, %v1771
    %v1793 = vadd.f32 %v1791, %v1792
    %v1794 = vtanh.pop %v1793
    %v1795 = vmul.f32 %v1790, %v1794
    %s1796 = scalar_lea.vmem [#allocation9], 56
    %1797 = vst [vmem:[%s1796] sm:$0xff] %v1795
    %1798 = vst [vmem:[#allocation2] sm:$0xff] %v1795
    %1799 = vst [vmem:[#allocation3] sm:$0xff] %v1793
    // Predicated region
    $region22: #{tpu_custom_call.1} parent=1 // pred_check
      %p1800 = pneg %p48
    $region23: #{tpu_custom_call.1} parent=1 // pred_check_branch
      %1802 = sbr.rel (%p1800) target = $region25
    $region24: #{tpu_custom_call.1} parent=1 // pred_region
      %1803 = vst [vmem:[#allocation10] sm:$0xff] %v1795
      %1804 = vst [vmem:[#allocation12] sm:$0xff] %v1793
    $region25: #{tpu_custom_call.1} parent=1 // pred_fallthru
      _
    // Predicated region
    $region26: #{tpu_custom_call.1} parent=1 // pred_check
      _
    $region27: #{tpu_custom_call.1} parent=1 // pred_check_branch
      %1806 = sbr.rel (0) target = $region29
    $region28: #{tpu_custom_call.1} parent=1 // pred_region
      %1808 = vsyncadd [#allocation6], 0
      %s1809 = sshll.u32 [#allocation9], 4
      %s1810 = int_to_ptr.vmem [resolvable:$true] %s1809
      %s1811 = sshll.u32 %s2, 4
      %s1812 = int_to_ptr.hbm [resolvable:$true] %s1811
      %1817 = dma.vmem_to_hbm [thread:$0]  %s1810, 1024, %s1812, [#allocation6], 128, 128, 8
    $region29: #{tpu_custom_call.1} parent=1 // pred_fallthru
      _
    // Predicated region
    $region30: #{tpu_custom_call.1} parent=1 // pred_check
      _
    $region31: #{tpu_custom_call.1} parent=1 // pred_check_branch
      %1819 = sbr.rel (0) target = $region33
    $region32: #{tpu_custom_call.1} parent=1 // pred_region
      %1821 = vsyncadd [#allocation11], 0
      %s1823 = sshll.u32 [#allocation10], 4
      %s1824 = int_to_ptr.vmem [resolvable:$true] %s1823
      %s1825 = sshll.u32 %s3, 4
      %s1826 = int_to_ptr.hbm [resolvable:$true] %s1825
      %1828 = dma.vmem_to_hbm [thread:$0]  %s1824, 128, %s1826, [#allocation11]
    $region33: #{tpu_custom_call.1} parent=1 // pred_fallthru
      _
    // Predicated region
    $region34: #{tpu_custom_call.1} parent=1 // pred_check
      _
    $region35: #{tpu_custom_call.1} parent=1 // pred_check_branch
      %1830 = sbr.rel (0) target = $region37
    $region36: #{tpu_custom_call.1} parent=1 // pred_region
      %1832 = vsyncadd [#allocation11], 0
      %s1834 = sshll.u32 [#allocation12], 4
      %s1835 = int_to_ptr.vmem [resolvable:$true] %s1834
      %s1836 = sshll.u32 %s4, 4
      %s1837 = int_to_ptr.hbm [resolvable:$true] %s1836
      %1839 = dma.vmem_to_hbm [thread:$0]  %s1835, 128, %s1837, [#allocation11]
    $region37: #{tpu_custom_call.1} parent=1 // pred_fallthru
      _
    // Predicated region
    $region38: #{tpu_custom_call.1} parent=1 // pred_check
      _
    $region39: #{tpu_custom_call.1} parent=1 // pred_check_branch
      %1841 = sbr.rel (0) target = $region41
    $region40: #{tpu_custom_call.1} parent=1 // pred_region
      %1843 = dma.done [#allocation6], 1024
    $region41: #{tpu_custom_call.1} parent=1 // pred_fallthru
      _
    // Predicated region
    $region42: #{tpu_custom_call.1} parent=1 // pred_check
      _
    $region43: #{tpu_custom_call.1} parent=1 // pred_check_branch
      %1845 = sbr.rel (0) target = $region45
    $region44: #{tpu_custom_call.1} parent=1 // pred_region
      %1847 = dma.done [#allocation11], 128
    $region45: #{tpu_custom_call.1} parent=1 // pred_fallthru
      _
    // Predicated region
    $region46: #{tpu_custom_call.1} parent=1 // pred_check
      _
    $region47: #{tpu_custom_call.1} parent=1 // pred_check_branch
      %1849 = sbr.rel (0) target = $region49
    $region48: #{tpu_custom_call.1} parent=1 // pred_region
      %1851 = dma.done [#allocation11], 128
    $region49: #{tpu_custom_call.1} parent=1 // pred_fallthru
      _
    %1852 = vsyncpa [#allocation5], 1
    %1853 = vsyncpa [#allocation8], 1
    %1854 = vsyncpa [#allocation6], 1
    %1855 = vsyncpa [#allocation11], 1

</llo_original>
